<compile_context>
chip_gen: v7x
topology: tpu7x:2x2x1
jax: 0.10.0
libtpu: 0.0.40
codegen_flags: <defaults>
</compile_context>

<pallas_src>
import math

import jax
import jax.numpy as jnp
from jax.experimental import pallas as pl
from jax.experimental.pallas import tpu as pltpu

# ---------------- config (stand-in for rwkv_config_1) ----------------
N_EMBD = 32
N_LAYER = 2
CTX_LEN = 16
VOCAB = 128

LN_EPS = 1e-5          # torch.nn.LayerNorm default
WKV_MIN = -1e38        # MIN_VALUE used by wkv_cuda

# TODO(synk): for production C, pad N_EMBD (and fused weight N dims) to multiples of 128
# for lane-dense vregs; at the toy C=32 we keep the native width.


def _ln(x, g, b):
    mu = jnp.mean(x, axis=-1, keepdims=True)
    var = jnp.mean(jnp.square(x - mu), axis=-1, keepdims=True)
    return (x - mu) * jax.lax.rsqrt(var + LN_EPS) * g + b


def _pick_batch_tiles(B, T):
    """Extent of the 'parallel' grid axis.

    v7x has 2 TensorCores per chip, so use >= 2 parallel batch tiles when the batch allows
    it; each tile must hold whole sequences and at least 8 rows (one sublane tile).  On
    v5e/v6e (1 TC) the extra tile is harmless at these sizes; for large models prefer a
    single big tile there so the matmul M dim (target >= 128/256 rows) is maximized.
    """
    if B % 2 == 0 and (B // 2) * T >= 8:
        return 2
    return 1


# ---------------------------------------------------------------------------
# fused (ln_in + N_LAYER x [TimeMix + ChannelMix] + ln_out + head) Pallas kernel
# ---------------------------------------------------------------------------
def run_model(x2d, fp, nbt, bt, T):
    """x2d: (nbt*T*bt, C) f32, rows in tile/time-major order (row = (n*T + t)*bt + j)."""
    C = N_EMBD
    V = fp['head'].shape[1]
    L = fp['wtmn'].shape[0]
    Rb = bt * T

    def kernel(x_ref, lnig, lnib,
               ln1g, ln1b, tw, tf, wtmn, wtmx, wo,
               ln2g, ln2b, wcmn, wcmx, wcv,
               lnog, lnob, whead,
               o_ref, xs_ref, k_scr, v_scr, wkv_scr):
        l = pl.program_id(1)

        @pl.when(l == 0)
        def _():
            # fold ln_in into the first layer iteration
            xs_ref[...] = _ln(x_ref[...], lnig[...], lnib[...])

        x = xs_ref[...]                                      # (Rb, C) f32, VMEM-resident

        # time-shift in the time-major tile: row r (= t*bt + j) takes row r - bt; rows of
        # the first timestep (r < bt) are zeroed.  The roll wrap of the last bt rows into
        # the first bt rows is masked away by exactly those zeros, so the shift never
        # leaks across sequences as long as each tile holds whole sequences.
        first_t = jax.lax.broadcasted_iota(jnp.int32, (Rb, C), 0) < bt

        def tshift(z):
            return jnp.where(first_t, 0.0, pltpu.roll(z, shift=bt, axis=0))

        # ------------------------------ TimeMix ------------------------------
        xn = _ln(x, ln1g[0], ln1b[0])
        xx = tshift(xn)
        # lerp folded into the weights; two accumulating matmuls (no concat relayout):
        #   [k | v | r] = xn @ (m .* W)  +  xx @ ((1 - m) .* W)
        kvr = (jnp.dot(xn.astype(jnp.bfloat16), wtmn[0], preferred_element_type=jnp.float32)
               + jnp.dot(xx.astype(jnp.bfloat16), wtmx[0], preferred_element_type=jnp.float32))
        k_scr[...] = kvr[:, :C]
        v_scr[...] = kvr[:, C:2 * C]
        sr = jax.nn.sigmoid(kvr[:, 2 * C:])

        # WKV recurrence (numerically identical to wkv_cuda.forward), batched over the bt
        # sequences of the tile.  Per-timestep rows are contiguous slabs in the time-major
        # layout and y_t is stored straight into the wkv scratch.  Only 2 exps per step:
        # since no = max(a, b), one of exp(a-no)/exp(b-no) is exactly 1.
        w = jnp.broadcast_to(tw[0], (bt, C))                 # -exp(time_decay), hoisted
        u = jnp.broadcast_to(tf[0], (bt, C))                 # time_first, hoisted

        def wkv_step(t, carry):
            p, q, o = carry
            r0 = pl.multiple_of(t * bt, bt) if bt > 1 else t
            kt = k_scr[pl.ds(r0, bt), :]
            vt = v_scr[pl.ds(r0, bt), :]
            d1 = o - (u + kt)                                # no = max(o, u + kt)
            e = jnp.exp(-jnp.abs(d1))
            ge1 = d1 >= 0.0
            e1 = jnp.where(ge1, 1.0, e)
            e2 = jnp.where(ge1, e, 1.0)
            wkv_scr[pl.ds(r0, bt), :] = (e1 * p + e2 * vt) * pl.reciprocal(e1 * q + e2,
                                                                           approx=True)
            wpo = w + o                                      # no2 = max(w + o, kt)
            d2 = wpo - kt
            e_ = jnp.exp(-jnp.abs(d2))
            ge2 = d2 >= 0.0
            e3 = jnp.where(ge2, 1.0, e_)
            e4 = jnp.where(ge2, e_, 1.0)
            return (e3 * p + e4 * vt, e3 * q + e4, jnp.maximum(wpo, kt))

        init = (jnp.zeros((bt, C), jnp.float32),
                jnp.zeros((bt, C), jnp.float32),
                jnp.full((bt, C), WKV_MIN, jnp.float32))
        jax.lax.fori_loop(0, T, wkv_step, init, unroll=min(T, 8))

        rwkv = (sr * wkv_scr[...]).astype(jnp.bfloat16)
        x = x + jnp.dot(rwkv, wo[0], preferred_element_type=jnp.float32)

        # ----------------------------- ChannelMix -----------------------------
        xn2 = _ln(x, ln2g[0], ln2b[0])
        xx2 = tshift(xn2)
        kr = (jnp.dot(xn2.astype(jnp.bfloat16), wcmn[0], preferred_element_type=jnp.float32)
              + jnp.dot(xx2.astype(jnp.bfloat16), wcmx[0], preferred_element_type=jnp.float32))
        kc = jnp.square(jnp.maximum(kr[:, :4 * C], 0.0))     # relu(k)^2
        rc = jax.nn.sigmoid(kr[:, 4 * C:])
        kv = jnp.dot(kc.astype(jnp.bfloat16), wcv[0], preferred_element_type=jnp.float32)
        xnew = x + rc * kv

        xs_ref[...] = xnew                                   # carry activation across layers

        # ln_out + head fused into the last layer iteration (no extra launch / HBM trip).
        # TODO(synk): at real vocab sizes tile the head over the vocab dim (multiples of 128).
        @pl.when(l == L - 1)
        def _():
            xo = _ln(xnew, lnog[...], lnob[...])
            o_ref[...] = jnp.dot(xo.astype(jnp.bfloat16), whead[...],
                                 preferred_element_type=jnp.float32)

    def lspec(shape):             # per-layer stacked params, indexed by the layer grid axis
        n0 = len(shape)
        return pl.BlockSpec((1,) + shape, lambda b, l, n0=n0: (l,) + (0,) * n0)

    cvec = pl.BlockSpec((1, C), lambda b, l: (0, 0))

    in_specs = [
        pl.BlockSpec((Rb, C), lambda b, l: (b, 0)),          # x tile (constant over layers)
        cvec, cvec,                                          # ln_in gamma / beta
        lspec((1, C)), lspec((1, C)),                        # ln1 gamma / beta
        lspec((1, C)), lspec((1, C)),                        # -exp(time_decay), time_first
        lspec((C, 3 * C)), lspec((C, 3 * C)),                # TimeMix fused W (xn / xx halves)
        lspec((C, C)),                                       # TimeMix output proj
        lspec((1, C)), lspec((1, C)),                        # ln2 gamma / beta
        lspec((C, 5 * C)), lspec((C, 5 * C)),                # ChannelMix fused W (xn / xx halves)
        lspec((4 * C, C)),                                   # ChannelMix value proj
        cvec, cvec,                                          # ln_out gamma / beta
        pl.BlockSpec((C, V), lambda b, l: (0, 0)),           # head weight
    ]

    # derive the VMEM limit from the actual tile footprint (double-buffered blocks +
    # scratch) with headroom, capped safely below v7x's 64 MiB per-core VMEM.
    vec_bytes = 10 * C * 4
    wt_bytes = (2 * C * 3 * C + C * C + 2 * C * 5 * C + 4 * C * C + C * V) * 2   # bf16
    io_bytes = Rb * C * 4 + Rb * V * 4
    scratch_bytes = 4 * Rb * C * 4
    est = 2 * (vec_bytes + wt_bytes + io_bytes) + scratch_bytes
    vmem_limit = int(min(48 * 1024 * 1024, max(8 * 1024 * 1024, 4 * est)))

    return pl.pallas_call(
        kernel,
        out_shape=jax.ShapeDtypeStruct((nbt * Rb, V), jnp.float32),
        grid=(nbt, L),
        in_specs=in_specs,
        out_specs=pl.BlockSpec((Rb, V), lambda b, l: (b, 0)),
        scratch_shapes=[pltpu.VMEM((Rb, C), jnp.float32)] * 4,   # xs, k, v, wkv
        compiler_params=pltpu.CompilerParams(
            dimension_semantics=("parallel", "arbitrary"),
            vmem_limit_bytes=vmem_limit),
    )(x2d, fp['ln_in_g'], fp['ln_in_b'],
      fp['ln1g'], fp['ln1b'], fp['tw'], fp['tf'], fp['wtmn'], fp['wtmx'], fp['wo'],
      fp['ln2g'], fp['ln2b'], fp['wcmn'], fp['wcmx'], fp['wcv'],
      fp['ln_out_g'], fp['ln_out_b'], fp['head'])


# ---------------------------------------------------------------------------
# forward
# ---------------------------------------------------------------------------
def rwkv_forward(fp, idx):
    B, T = idx.shape
    assert T <= CTX_LEN
    nbt = _pick_batch_tiles(B, T)
    bt = B // nbt
    # Embedding gather (plain JAX glue), producing rows directly in the kernel's
    # tile/time-major order: row = (n*T + t)*bt + j for sequence n*bt + j at time t.
    idx_tm = jnp.transpose(idx.reshape(nbt, bt, T), (0, 2, 1)).reshape(-1)
    x = jnp.take(fp['emb'], idx_tm, axis=0)                     # (nbt*T*bt, C)
    logits = run_model(x, fp, nbt, bt, T)                       # (nbt*T*bt, VOCAB)
    logits = jnp.transpose(logits.reshape(nbt, T, bt, VOCAB),
                           (0, 2, 1, 3)).reshape(B, T, VOCAB)
    # TODO(synk): cross_entropy loss + L2Wrap are training-time only (L2Wrap forward is the
    # identity on the loss); with targets=None the model output is the logits.
    return logits


# ---------------------------------------------------------------------------
# deterministic parameter construction (mirrors the PyTorch __init__ formulas)
# ---------------------------------------------------------------------------
def init_params(key):
    C, V, L = N_EMBD, VOCAB, N_LAYER
    keys = jax.random.split(key, 2 + 7 * L)
    kit = iter(keys)

    def nrm(shape, std):
        return jax.random.normal(next(kit), shape, jnp.float32) * std

    params = {
        'emb': nrm((V, C), 1e-5),
        'ln_in': (jnp.ones((1, C), jnp.float32), jnp.zeros((1, C), jnp.float32)),
        'ln_out': (jnp.ones((1, C), jnp.float32), jnp.zeros((1, C), jnp.float32)),
        'head': nrm((C, V), 0.01),
        'blocks': [],
    }

    i = jnp.arange(C, dtype=jnp.float32)
    xpos = (i / C).reshape(1, C)
    for l in range(L):
        ratio_0_to_1 = l / (L - 1)
        ratio_1_to_almost0 = 1.0 - l / L
        decay_speed = -5.0 + 8.0 * (i / (C - 1)) ** (0.7 + 1.3 * ratio_0_to_1)
        zigzag = ((jnp.arange(1, C + 1) % 3) - 1).astype(jnp.float32) * 0.5
        time_first = jnp.ones((C,), jnp.float32) * math.log(0.3) + zigzag
        bp = {
            'ln1g': jnp.ones((1, C), jnp.float32), 'ln1b': jnp.zeros((1, C), jnp.float32),
            'ln2g': jnp.ones((1, C), jnp.float32), 'ln2b': jnp.zeros((1, C), jnp.float32),
            'td': decay_speed.reshape(1, C).astype(jnp.float32),
            'tf': time_first.reshape(1, C),
            'tmk': (xpos ** ratio_1_to_almost0).astype(jnp.float32),
            'tmv': (xpos ** ratio_1_to_almost0 + 0.3 * ratio_0_to_1).astype(jnp.float32),
            'tmr': (xpos ** (0.5 * ratio_1_to_almost0)).astype(jnp.float32),
            'cmk': (xpos ** ratio_1_to_almost0).astype(jnp.float32),
            'cmr': (xpos ** ratio_1_to_almost0).astype(jnp.float32),
            'wk': nrm((C, C), 0.01),
            'wv': nrm((C, C), 0.01),
            'wr': nrm((C, C), 0.01),
            'wo': nrm((C, C), 0.01),
            'cwk': nrm((C, 4 * C), 0.01),
            'cwr': nrm((C, C), 0.01),
            'cwv': nrm((4 * C, C), 0.01),
        }
        params['blocks'].append(bp)
    return params


def fold_params(params):
    """Fold the time-mix lerps into bf16 projection-weight pairs, precompute -exp(decay),
    and stack per-layer params along a leading layer axis."""
    C = N_EMBD

    def srows(m, w):   # diag(m) @ w,  m: (1,C), w: (C,K)
        return m.reshape(C, 1) * w

    def stk(name):
        return jnp.stack([bp[name] for bp in params['blocks']])      # (L, 1, C)

    wtmn, wtmx, wcmn, wcmx = [], [], [], []
    for bp in params['blocks']:
        wtmn.append(jnp.concatenate([srows(bp['tmk'], bp['wk']),
                                     srows(bp['tmv'], bp['wv']),
                                     srows(bp['tmr'], bp['wr'])], axis=1))        # (C, 3C)
        wtmx.append(jnp.concatenate([srows(1.0 - bp['tmk'], bp['wk']),
                                     srows(1.0 - bp['tmv'], bp['wv']),
                                     srows(1.0 - bp['tmr'], bp['wr'])], axis=1))
        wcmn.append(jnp.concatenate([srows(bp['cmk'], bp['cwk']),
                                     srows(bp['cmr'], bp['cwr'])], axis=1))        # (C, 5C)
        wcmx.append(jnp.concatenate([srows(1.0 - bp['cmk'], bp['cwk']),
                                     srows(1.0 - bp['cmr'], bp['cwr'])], axis=1))

    return {
        'emb': params['emb'],
        'ln_in_g': params['ln_in'][0], 'ln_in_b': params['ln_in'][1],
        'ln_out_g': params['ln_out'][0], 'ln_out_b': params['ln_out'][1],
        'head': params['head'].astype(jnp.bfloat16),
        'ln1g': stk('ln1g'), 'ln1b': stk('ln1b'),
        'ln2g': stk('ln2g'), 'ln2b': stk('ln2b'),
        'tw': -jnp.exp(stk('td')),                    # w = -exp(time_decay), host-side
        'tf': stk('tf'),
        'wtmn': jnp.stack(wtmn).astype(jnp.bfloat16),
        'wtmx': jnp.stack(wtmx).astype(jnp.bfloat16),
        'wo': jnp.stack([bp['wo'] for bp in params['blocks']]).astype(jnp.bfloat16),
        'wcmn': jnp.stack(wcmn).astype(jnp.bfloat16),
        'wcmx': jnp.stack(wcmx).astype(jnp.bfloat16),
        'wcv': jnp.stack([bp['cwv'] for bp in params['blocks']]).astype(jnp.bfloat16),
    }


# ---------------------------------------------------------------------------
# pure-JAX f32 reference (for a silent correctness check)
# ---------------------------------------------------------------------------
def _ref_ln(x, g, b):
    mu = x.mean(-1, keepdims=True)
    var = jnp.square(x - mu).mean(-1, keepdims=True)
    return (x - mu) * jax.lax.rsqrt(var + LN_EPS) * g + b


def _ref_shift(x):  # (B,T,C): xx[:,t] = x[:,t-1], xx[:,0] = 0
    return jnp.concatenate([jnp.zeros_like(x[:, :1]), x[:, :-1]], axis=1)


def _ref_wkv(w, u, k, v):
    B, T, C = k.shape
    p = jnp.zeros((B, C)); q = jnp.zeros((B, C)); o = jnp.full((B, C), WKV_MIN)
    ys = []
    for t in range(T):
        kt, vt = k[:, t], v[:, t]
        no = jnp.maximum(o, u + kt)
        a, bb = jnp.exp(o - no), jnp.exp(u + kt - no)
        ys.append((a * p + bb * vt) / (a * q + bb))
        no2 = jnp.maximum(w + o, kt)
        a2, b2 = jnp.exp(w + o - no2), jnp.exp(kt - no2)
        p, q, o = a2 * p + b2 * vt, a2 * q + b2, no2
    return jnp.stack(ys, axis=1)


def ref_forward(params, idx):
    x = params['emb'][idx]
    x = _ref_ln(x, *params['ln_in'])
    for bp in params['blocks']:
        xn = _ref_ln(x, bp['ln1g'], bp['ln1b'])
        xx = _ref_shift(xn)
        xk = xn * bp['tmk'] + xx * (1 - bp['tmk'])
        xv = xn * bp['tmv'] + xx * (1 - bp['tmv'])
        xr = xn * bp['tmr'] + xx * (1 - bp['tmr'])
        k, v = xk @ bp['wk'], xv @ bp['wv']
        sr = jax.nn.sigmoid(xr @ bp['wr'])
        wkv = _ref_wkv(-jnp.exp(bp['td'][0]), bp['tf'][0], k, v)
        x = x + (sr * wkv) @ bp['wo']
        xn2 = _ref_ln(x, bp['ln2g'], bp['ln2b'])
        xx2 = _ref_shift(xn2)
        xk2 = xn2 * bp['cmk'] + xx2 * (1 - bp['cmk'])
        xr2 = xn2 * bp['cmr'] + xx2 * (1 - bp['cmr'])
        kc = jnp.square(jnp.maximum(xk2 @ bp['cwk'], 0.0))
        x = x + jax.nn.sigmoid(xr2 @ bp['cwr']) * (kc @ bp['cwv'])
    x = _ref_ln(x, *params['ln_out'])
    return x @ params['head']


# ---------------------------------------------------------------------------
if __name__ == "__main__":
    key = jax.random.PRNGKey(0)
    pkey, ikey = jax.random.split(key)
    params = init_params(pkey)
    fparams = fold_params(params)

    B, T = 2, 8
    idx = jax.random.randint(ikey, (B, T), 0, VOCAB, dtype=jnp.int32)

    fwd = jax.jit(rwkv_forward)
    logits = jax.block_until_ready(fwd(fparams, idx))
    ref = jax.block_until_ready(ref_forward(params, idx))

    assert logits.shape == (B, T, VOCAB) and logits.dtype == jnp.float32
    # tolerance accounts for bf16 MXU operands + approx reciprocal (logits scale ~0.05)
    max_err = float(jnp.max(jnp.abs(logits - ref)))
    assert max_err < 4e-3, f"kernel/reference mismatch: {max_err}"
    print("KERNEL_OK")
</pallas_src>

<mosaic_0001>
module attributes {stable_mosaic.version = 11 : i64} {
  func.func @kernel(%arg0: i32, %arg1: i32, %arg2: memref<8x32xf32, #tpu.memory_space<vmem>>, %arg3: memref<1x32xf32, #tpu.memory_space<vmem>>, %arg4: memref<1x32xf32, #tpu.memory_space<vmem>>, %arg5: memref<1x1x32xf32, #tpu.memory_space<vmem>>, %arg6: memref<1x1x32xf32, #tpu.memory_space<vmem>>, %arg7: memref<1x1x32xf32, #tpu.memory_space<vmem>>, %arg8: memref<1x1x32xf32, #tpu.memory_space<vmem>>, %arg9: memref<1x32x96xbf16, #tpu.memory_space<vmem>>, %arg10: memref<1x32x96xbf16, #tpu.memory_space<vmem>>, %arg11: memref<1x32x32xbf16, #tpu.memory_space<vmem>>, %arg12: memref<1x1x32xf32, #tpu.memory_space<vmem>>, %arg13: memref<1x1x32xf32, #tpu.memory_space<vmem>>, %arg14: memref<1x32x160xbf16, #tpu.memory_space<vmem>>, %arg15: memref<1x32x160xbf16, #tpu.memory_space<vmem>>, %arg16: memref<1x128x32xbf16, #tpu.memory_space<vmem>>, %arg17: memref<1x32xf32, #tpu.memory_space<vmem>>, %arg18: memref<1x32xf32, #tpu.memory_space<vmem>>, %arg19: memref<32x128xbf16, #tpu.memory_space<vmem>>, %arg20: memref<8x128xf32, #tpu.memory_space<vmem>>, %arg21: memref<8x32xf32, #tpu.memory_space<vmem>>, %arg22: memref<8x32xf32, #tpu.memory_space<vmem>>, %arg23: memref<8x32xf32, #tpu.memory_space<vmem>>, %arg24: memref<8x32xf32, #tpu.memory_space<vmem>>) attributes {dimension_semantics = [#tpu.dimension_semantics<parallel>, #tpu.dimension_semantics<arbitrary>], iteration_bounds = array<i64: 2, 2>, scalar_prefetch = 0 : i64, scratch_operands = 4 : i64, tpu.core_type = #tpu.core_type<tc>, window_params = [{transform_indices = @transform_0, window_bounds = array<i64: 8, 32>}, {pipeline_mode = #tpu.pipeline_mode<synchronous>, transform_indices = @transform_1, window_bounds = array<i64: 1, 32>}, {pipeline_mode = #tpu.pipeline_mode<synchronous>, transform_indices = @transform_2, window_bounds = array<i64: 1, 32>}, {transform_indices = @transform_3, window_bounds = array<i64: 1, 1, 32>}, {transform_indices = @transform_4, window_bounds = array<i64: 1, 1, 32>}, {transform_indices = @transform_5, window_bounds = array<i64: 1, 1, 32>}, {transform_indices = @transform_6, window_bounds = array<i64: 1, 1, 32>}, {transform_indices = @transform_7, window_bounds = array<i64: 1, 32, 96>}, {transform_indices = @transform_8, window_bounds = array<i64: 1, 32, 96>}, {transform_indices = @transform_9, window_bounds = array<i64: 1, 32, 32>}, {transform_indices = @transform_10, window_bounds = array<i64: 1, 1, 32>}, {transform_indices = @transform_11, window_bounds = array<i64: 1, 1, 32>}, {transform_indices = @transform_12, window_bounds = array<i64: 1, 32, 160>}, {transform_indices = @transform_13, window_bounds = array<i64: 1, 32, 160>}, {transform_indices = @transform_14, window_bounds = array<i64: 1, 128, 32>}, {pipeline_mode = #tpu.pipeline_mode<synchronous>, transform_indices = @transform_15, window_bounds = array<i64: 1, 32>}, {pipeline_mode = #tpu.pipeline_mode<synchronous>, transform_indices = @transform_16, window_bounds = array<i64: 1, 32>}, {pipeline_mode = #tpu.pipeline_mode<synchronous>, transform_indices = @transform_17, window_bounds = array<i64: 32, 128>}, {transform_indices = @transform_18, window_bounds = array<i64: 8, 128>}]} {
    %c0_i32 = arith.constant 0 : i32
    %0 = arith.cmpi eq, %arg1, %c0_i32 : i32
    %1 = arith.extui %0 : i1 to i32
    %c0_i32_0 = arith.constant 0 : i32
    %2 = arith.cmpi ne, %1, %c0_i32_0 : i32
    scf.if %2 {
      %c0_163 = arith.constant 0 : index
      %c0_164 = arith.constant 0 : index
      %471 = vector.load %arg2[%c0_163, %c0_164] : memref<8x32xf32, #tpu.memory_space<vmem>>, vector<8x32xf32>
      %c0_165 = arith.constant 0 : index
      %c0_166 = arith.constant 0 : index
      %472 = vector.load %arg3[%c0_165, %c0_166] : memref<1x32xf32, #tpu.memory_space<vmem>>, vector<1x32xf32>
      %c0_167 = arith.constant 0 : index
      %c0_168 = arith.constant 0 : index
      %473 = vector.load %arg4[%c0_167, %c0_168] : memref<1x32xf32, #tpu.memory_space<vmem>>, vector<1x32xf32>
      %cst_169 = arith.constant dense<0.000000e+00> : vector<8xf32>
      %474 = vector.multi_reduction <add>, %471, %cst_169 [1] : vector<8x32xf32> to vector<8xf32>
      %475 = vector.shape_cast %474 : vector<8xf32> to vector<8x1xf32>
      %cst_170 = arith.constant 3.200000e+01 : f32
      %476 = vector.broadcast %cst_170 : f32 to vector<8x1xf32>
      %477 = arith.divf %475, %476 : vector<8x1xf32>
      %478 = vector.broadcast %477 : vector<8x1xf32> to vector<8x32xf32>
      %479 = arith.subf %471, %478 : vector<8x32xf32>
      %480 = arith.mulf %479, %479 : vector<8x32xf32>
      %cst_171 = arith.constant dense<0.000000e+00> : vector<8xf32>
      %481 = vector.multi_reduction <add>, %480, %cst_171 [1] : vector<8x32xf32> to vector<8xf32>
      %482 = vector.shape_cast %481 : vector<8xf32> to vector<8x1xf32>
      %cst_172 = arith.constant 3.200000e+01 : f32
      %483 = vector.broadcast %cst_172 : f32 to vector<8x1xf32>
      %484 = arith.divf %482, %483 : vector<8x1xf32>
      %485 = vector.broadcast %477 : vector<8x1xf32> to vector<8x32xf32>
      %486 = arith.subf %471, %485 : vector<8x32xf32>
      %cst_173 = arith.constant 9.99999974E-6 : f32
      %487 = vector.broadcast %cst_173 : f32 to vector<8x1xf32>
      %488 = arith.addf %484, %487 : vector<8x1xf32>
      %489 = math.rsqrt %488 : vector<8x1xf32>
      %490 = vector.broadcast %489 : vector<8x1xf32> to vector<8x32xf32>
      %491 = arith.mulf %486, %490 : vector<8x32xf32>
      %492 = vector.broadcast %472 : vector<1x32xf32> to vector<8x32xf32>
      %493 = arith.mulf %491, %492 : vector<8x32xf32>
      %494 = vector.broadcast %473 : vector<1x32xf32> to vector<8x32xf32>
      %495 = arith.addf %493, %494 : vector<8x32xf32>
      %c0_174 = arith.constant 0 : index
      %c0_175 = arith.constant 0 : index
      %496 = vector.load %arg21[%c0_174, %c0_175] : memref<8x32xf32, #tpu.memory_space<vmem>>, vector<8x32xf32>
      tpu.vector_store %arg21[%c0_174, %c0_175], %495 {strides = array<i32>} : memref<8x32xf32, #tpu.memory_space<vmem>>, vector<8x32xf32>,
    } else {
    }
    %c0 = arith.constant 0 : index
    %c0_1 = arith.constant 0 : index
    %3 = vector.load %arg21[%c0, %c0_1] : memref<8x32xf32, #tpu.memory_space<vmem>>, vector<8x32xf32>
    %4 = tpu.iota {dimensions = array<i32: 0>} : vector<8x32xi32>
    %c1_i32 = arith.constant 1 : i32
    %5 = vector.broadcast %c1_i32 : i32 to vector<8x32xi32>
    %6 = arith.cmpi slt, %4, %5 : vector<8x32xi32>
    %c0_2 = arith.constant 0 : index
    %c0_3 = arith.constant 0 : index
    %c0_4 = arith.constant 0 : index
    %7 = vector.load %arg5[%c0_2, %c0_3, %c0_4] : memref<1x1x32xf32, #tpu.memory_space<vmem>>, vector<1x1x32xf32>
    %8 = vector.shape_cast %7 : vector<1x1x32xf32> to vector<1x32xf32>
    %c0_5 = arith.constant 0 : index
    %c0_6 = arith.constant 0 : index
    %c0_7 = arith.constant 0 : index
    %9 = vector.load %arg6[%c0_5, %c0_6, %c0_7] : memref<1x1x32xf32, #tpu.memory_space<vmem>>, vector<1x1x32xf32>
    %10 = vector.shape_cast %9 : vector<1x1x32xf32> to vector<1x32xf32>
    %cst = arith.constant dense<0.000000e+00> : vector<8xf32>
    %11 = vector.multi_reduction <add>, %3, %cst [1] : vector<8x32xf32> to vector<8xf32>
    %12 = vector.shape_cast %11 : vector<8xf32> to vector<8x1xf32>
    %cst_8 = arith.constant 3.200000e+01 : f32
    %13 = vector.broadcast %cst_8 : f32 to vector<8x1xf32>
    %14 = arith.divf %12, %13 : vector<8x1xf32>
    %15 = vector.broadcast %14 : vector<8x1xf32> to vector<8x32xf32>
    %16 = arith.subf %3, %15 : vector<8x32xf32>
    %17 = arith.mulf %16, %16 : vector<8x32xf32>
    %cst_9 = arith.constant dense<0.000000e+00> : vector<8xf32>
    %18 = vector.multi_reduction <add>, %17, %cst_9 [1] : vector<8x32xf32> to vector<8xf32>
    %19 = vector.shape_cast %18 : vector<8xf32> to vector<8x1xf32>
    %cst_10 = arith.constant 3.200000e+01 : f32
    %20 = vector.broadcast %cst_10 : f32 to vector<8x1xf32>
    %21 = arith.divf %19, %20 : vector<8x1xf32>
    %22 = vector.broadcast %14 : vector<8x1xf32> to vector<8x32xf32>
    %23 = arith.subf %3, %22 : vector<8x32xf32>
    %cst_11 = arith.constant 9.99999974E-6 : f32
    %24 = vector.broadcast %cst_11 : f32 to vector<8x1xf32>
    %25 = arith.addf %21, %24 : vector<8x1xf32>
    %26 = math.rsqrt %25 : vector<8x1xf32>
    %27 = vector.broadcast %26 : vector<8x1xf32> to vector<8x32xf32>
    %28 = arith.mulf %23, %27 : vector<8x32xf32>
    %29 = vector.broadcast %8 : vector<1x32xf32> to vector<8x32xf32>
    %30 = arith.mulf %28, %29 : vector<8x32xf32>
    %31 = vector.broadcast %10 : vector<1x32xf32> to vector<8x32xf32>
    %32 = arith.addf %30, %31 : vector<8x32xf32>
    %c1_i32_12 = arith.constant 1 : i32
    %33 = tpu.dynamic_rotate %32 by %c1_i32_12 dim 0 : vector<8x32xf32>, i32 -> vector<8x32xf32>
    %cst_13 = arith.constant 0.000000e+00 : f32
    %34 = vector.broadcast %cst_13 : f32 to vector<8x32xf32>
    %35 = arith.select %6, %34, %33 : vector<8x32xi1>, vector<8x32xf32>
    %36 = arith.truncf %32 : vector<8x32xf32> to vector<8x32xbf16>
    %c0_14 = arith.constant 0 : index
    %c0_15 = arith.constant 0 : index
    %c0_16 = arith.constant 0 : index
    %37 = vector.load %arg9[%c0_14, %c0_15, %c0_16] : memref<1x32x96xbf16, #tpu.memory_space<vmem>>, vector<1x32x96xbf16>
    %38 = vector.shape_cast %37 : vector<1x32x96xbf16> to vector<32x96xbf16>
    %cst_17 = arith.constant dense<0.000000e+00> : vector<8x96xf32>
    %39 = tpu.matmul %36, %38, %cst_17 {dimension_numbers = #tpu.dot_dimension_numbers<[1], [0], [0], [1], [0, 0, 1, 1], [], []>} : vector<8x32xbf16>, vector<32x96xbf16>, vector<8x96xf32> -> vector<8x96xf32>
    %40 = arith.truncf %35 : vector<8x32xf32> to vector<8x32xbf16>
    %c0_18 = arith.constant 0 : index
    %c0_19 = arith.constant 0 : index
    %c0_20 = arith.constant 0 : index
    %41 = vector.load %arg10[%c0_18, %c0_19, %c0_20] : memref<1x32x96xbf16, #tpu.memory_space<vmem>>, vector<1x32x96xbf16>
    %42 = vector.shape_cast %41 : vector<1x32x96xbf16> to vector<32x96xbf16>
    %cst_21 = arith.constant dense<0.000000e+00> : vector<8x96xf32>
    %43 = tpu.matmul %40, %42, %cst_21 {dimension_numbers = #tpu.dot_dimension_numbers<[1], [0], [0], [1], [0, 0, 1, 1], [], []>} : vector<8x32xbf16>, vector<32x96xbf16>, vector<8x96xf32> -> vector<8x96xf32>
    %44 = arith.addf %39, %43 : vector<8x96xf32>
    %45 = vector.extract_strided_slice %44 {offsets = [0, 0], sizes = [8, 32], strides = [1, 1]} : vector<8x96xf32> to vector<8x32xf32>
    %c0_22 = arith.constant 0 : index
    %c0_23 = arith.constant 0 : index
    %46 = vector.load %arg22[%c0_22, %c0_23] : memref<8x32xf32, #tpu.memory_space<vmem>>, vector<8x32xf32>
    tpu.vector_store %arg22[%c0_22, %c0_23], %45 {strides = array<i32>} : memref<8x32xf32, #tpu.memory_space<vmem>>, vector<8x32xf32>,
    %47 = vector.extract_strided_slice %44 {offsets = [0, 32], sizes = [8, 32], strides = [1, 1]} : vector<8x96xf32> to vector<8x32xf32>
    %c0_24 = arith.constant 0 : index
    %c0_25 = arith.constant 0 : index
    %48 = vector.load %arg23[%c0_24, %c0_25] : memref<8x32xf32, #tpu.memory_space<vmem>>, vector<8x32xf32>
    tpu.vector_store %arg23[%c0_24, %c0_25], %47 {strides = array<i32>} : memref<8x32xf32, #tpu.memory_space<vmem>>, vector<8x32xf32>,
    %49 = vector.extract_strided_slice %44 {offsets = [0, 64], sizes = [8, 32], strides = [1, 1]} : vector<8x96xf32> to vector<8x32xf32>
    %50 = arith.negf %49 : vector<8x32xf32>
    %51 = math.exp %50 : vector<8x32xf32>
    %cst_26 = arith.constant 1.000000e+00 : f32
    %52 = vector.broadcast %cst_26 : f32 to vector<8x32xf32>
    %53 = arith.addf %52, %51 : vector<8x32xf32>
    %54 = arith.divf %52, %53 : vector<8x32xf32>
    %c0_27 = arith.constant 0 : index
    %c0_28 = arith.constant 0 : index
    %c0_29 = arith.constant 0 : index
    %55 = vector.load %arg7[%c0_27, %c0_28, %c0_29] : memref<1x1x32xf32, #tpu.memory_space<vmem>>, vector<1x1x32xf32>
    %56 = vector.shape_cast %55 : vector<1x1x32xf32> to vector<1x32xf32>
    %c0_30 = arith.constant 0 : index
    %c0_31 = arith.constant 0 : index
    %c0_32 = arith.constant 0 : index
    %57 = vector.load %arg8[%c0_30, %c0_31, %c0_32] : memref<1x1x32xf32, #tpu.memory_space<vmem>>, vector<1x1x32xf32>
    %58 = vector.shape_cast %57 : vector<1x1x32xf32> to vector<1x32xf32>
    %cst_33 = arith.constant 0.000000e+00 : f32
    %59 = vector.broadcast %cst_33 : f32 to vector<1x32xf32>
    %cst_34 = arith.constant 0.000000e+00 : f32
    %60 = vector.broadcast %cst_34 : f32 to vector<1x32xf32>
    %cst_35 = arith.constant -9.99999968E+37 : f32
    %61 = vector.broadcast %cst_35 : f32 to vector<1x32xf32>
    %c0_i32_36 = arith.constant 0 : i32
    %62 = arith.index_cast %c0_i32_36 : i32 to index
    %c0_37 = arith.constant 0 : index
    %63 = vector.load %arg22[%62, %c0_37] : memref<8x32xf32, #tpu.memory_space<vmem>>, vector<1x32xf32>
    %64 = arith.index_cast %c0_i32_36 : i32 to index
    %c0_38 = arith.constant 0 : index
    %65 = vector.load %arg23[%64, %c0_38] : memref<8x32xf32, #tpu.memory_space<vmem>>, vector<1x32xf32>
    %66 = arith.addf %58, %63 : vector<1x32xf32>
    %67 = arith.subf %61, %66 : vector<1x32xf32>
    %68 = math.absf %67 : vector<1x32xf32>
    %cst_39 = arith.constant 0.000000e+00 : f32
    %69 = vector.broadcast %cst_39 : f32 to vector<1x32xf32>
    %70 = arith.subf %69, %68 : vector<1x32xf32>
    %71 = math.exp %70 : vector<1x32xf32>
    %cst_40 = arith.constant 0.000000e+00 : f32
    %72 = vector.broadcast %cst_40 : f32 to vector<1x32xf32>
    %73 = arith.cmpf oge, %67, %72 : vector<1x32xf32>
    %cst_41 = arith.constant 1.000000e+00 : f32
    %74 = vector.broadcast %cst_41 : f32 to vector<1x32xf32>
    %75 = arith.select %73, %74, %71 : vector<1x32xi1>, vector<1x32xf32>
    %cst_42 = arith.constant 1.000000e+00 : f32
    %76 = vector.broadcast %cst_42 : f32 to vector<1x32xf32>
    %77 = arith.select %73, %71, %76 : vector<1x32xi1>, vector<1x32xf32>
    %78 = arith.mulf %75, %59 : vector<1x32xf32>
    %79 = arith.mulf %77, %65 : vector<1x32xf32>
    %80 = arith.addf %78, %79 : vector<1x32xf32>
    %81 = arith.mulf %75, %60 : vector<1x32xf32>
    %82 = arith.addf %81, %77 : vector<1x32xf32>
    %83 = tpu.reciprocal %82 {approx = true} : vector<1x32xf32> -> vector<1x32xf32>
    %84 = arith.mulf %80, %83 : vector<1x32xf32>
    %85 = arith.index_cast %c0_i32_36 : i32 to index
    %c0_43 = arith.constant 0 : index
    %86 = vector.load %arg24[%85, %c0_43] : memref<8x32xf32, #tpu.memory_space<vmem>>, vector<1x32xf32>
    tpu.vector_store %arg24[%85, %c0_43], %84 {strides = array<i32>} : memref<8x32xf32, #tpu.memory_space<vmem>>, vector<1x32xf32>,
    %87 = arith.addf %56, %61 : vector<1x32xf32>
    %88 = arith.subf %87, %63 : vector<1x32xf32>
    %89 = math.absf %88 : vector<1x32xf32>
    %cst_44 = arith.constant 0.000000e+00 : f32
    %90 = vector.broadcast %cst_44 : f32 to vector<1x32xf32>
    %91 = arith.subf %90, %89 : vector<1x32xf32>
    %92 = math.exp %91 : vector<1x32xf32>
    %cst_45 = arith.constant 0.000000e+00 : f32
    %93 = vector.broadcast %cst_45 : f32 to vector<1x32xf32>
    %94 = arith.cmpf oge, %88, %93 : vector<1x32xf32>
    %cst_46 = arith.constant 1.000000e+00 : f32
    %95 = vector.broadcast %cst_46 : f32 to vector<1x32xf32>
    %96 = arith.select %94, %95, %92 : vector<1x32xi1>, vector<1x32xf32>
    %cst_47 = arith.constant 1.000000e+00 : f32
    %97 = vector.broadcast %cst_47 : f32 to vector<1x32xf32>
    %98 = arith.select %94, %92, %97 : vector<1x32xi1>, vector<1x32xf32>
    %99 = arith.mulf %96, %59 : vector<1x32xf32>
    %100 = arith.mulf %98, %65 : vector<1x32xf32>
    %101 = arith.addf %99, %100 : vector<1x32xf32>
    %102 = arith.mulf %96, %60 : vector<1x32xf32>
    %103 = arith.addf %102, %98 : vector<1x32xf32>
    %104 = arith.maximumf %87, %63 : vector<1x32xf32>
    %c1_i32_48 = arith.constant 1 : i32
    %105 = arith.index_cast %c1_i32_48 : i32 to index
    %c0_49 = arith.constant 0 : index
    %106 = vector.load %arg22[%105, %c0_49] : memref<8x32xf32, #tpu.memory_space<vmem>>, vector<1x32xf32>
    %107 = arith.index_cast %c1_i32_48 : i32 to index
    %c0_50 = arith.constant 0 : index
    %108 = vector.load %arg23[%107, %c0_50] : memref<8x32xf32, #tpu.memory_space<vmem>>, vector<1x32xf32>
    %109 = arith.addf %58, %106 : vector<1x32xf32>
    %110 = arith.subf %104, %109 : vector<1x32xf32>
    %111 = math.absf %110 : vector<1x32xf32>
    %cst_51 = arith.constant 0.000000e+00 : f32
    %112 = vector.broadcast %cst_51 : f32 to vector<1x32xf32>
    %113 = arith.subf %112, %111 : vector<1x32xf32>
    %114 = math.exp %113 : vector<1x32xf32>
    %cst_52 = arith.constant 0.000000e+00 : f32
    %115 = vector.broadcast %cst_52 : f32 to vector<1x32xf32>
    %116 = arith.cmpf oge, %110, %115 : vector<1x32xf32>
    %cst_53 = arith.constant 1.000000e+00 : f32
    %117 = vector.broadcast %cst_53 : f32 to vector<1x32xf32>
    %118 = arith.select %116, %117, %114 : vector<1x32xi1>, vector<1x32xf32>
    %cst_54 = arith.constant 1.000000e+00 : f32
    %119 = vector.broadcast %cst_54 : f32 to vector<1x32xf32>
    %120 = arith.select %116, %114, %119 : vector<1x32xi1>, vector<1x32xf32>
    %121 = arith.mulf %118, %101 : vector<1x32xf32>
    %122 = arith.mulf %120, %108 : vector<1x32xf32>
    %123 = arith.addf %121, %122 : vector<1x32xf32>
    %124 = arith.mulf %118, %103 : vector<1x32xf32>
    %125 = arith.addf %124, %120 : vector<1x32xf32>
    %126 = tpu.reciprocal %125 {approx = true} : vector<1x32xf32> -> vector<1x32xf32>
    %127 = arith.mulf %123, %126 : vector<1x32xf32>
    %128 = arith.index_cast %c1_i32_48 : i32 to index
    %c0_55 = arith.constant 0 : index
    %129 = vector.load %arg24[%128, %c0_55] : memref<8x32xf32, #tpu.memory_space<vmem>>, vector<1x32xf32>
    tpu.vector_store %arg24[%128, %c0_55], %127 {strides = array<i32>} : memref<8x32xf32, #tpu.memory_space<vmem>>, vector<1x32xf32>,
    %130 = arith.addf %56, %104 : vector<1x32xf32>
    %131 = arith.subf %130, %106 : vector<1x32xf32>
    %132 = math.absf %131 : vector<1x32xf32>
    %cst_56 = arith.constant 0.000000e+00 : f32
    %133 = vector.broadcast %cst_56 : f32 to vector<1x32xf32>
    %134 = arith.subf %133, %132 : vector<1x32xf32>
    %135 = math.exp %134 : vector<1x32xf32>
    %cst_57 = arith.constant 0.000000e+00 : f32
    %136 = vector.broadcast %cst_57 : f32 to vector<1x32xf32>
    %137 = arith.cmpf oge, %131, %136 : vector<1x32xf32>
    %cst_58 = arith.constant 1.000000e+00 : f32
    %138 = vector.broadcast %cst_58 : f32 to vector<1x32xf32>
    %139 = arith.select %137, %138, %135 : vector<1x32xi1>, vector<1x32xf32>
    %cst_59 = arith.constant 1.000000e+00 : f32
    %140 = vector.broadcast %cst_59 : f32 to vector<1x32xf32>
    %141 = arith.select %137, %135, %140 : vector<1x32xi1>, vector<1x32xf32>
    %142 = arith.mulf %139, %101 : vector<1x32xf32>
    %143 = arith.mulf %141, %108 : vector<1x32xf32>
    %144 = arith.addf %142, %143 : vector<1x32xf32>
    %145 = arith.mulf %139, %103 : vector<1x32xf32>
    %146 = arith.addf %145, %141 : vector<1x32xf32>
    %147 = arith.maximumf %130, %106 : vector<1x32xf32>
    %c2_i32 = arith.constant 2 : i32
    %148 = arith.index_cast %c2_i32 : i32 to index
    %c0_60 = arith.constant 0 : index
    %149 = vector.load %arg22[%148, %c0_60] : memref<8x32xf32, #tpu.memory_space<vmem>>, vector<1x32xf32>
    %150 = arith.index_cast %c2_i32 : i32 to index
    %c0_61 = arith.constant 0 : index
    %151 = vector.load %arg23[%150, %c0_61] : memref<8x32xf32, #tpu.memory_space<vmem>>, vector<1x32xf32>
    %152 = arith.addf %58, %149 : vector<1x32xf32>
    %153 = arith.subf %147, %152 : vector<1x32xf32>
    %154 = math.absf %153 : vector<1x32xf32>
    %cst_62 = arith.constant 0.000000e+00 : f32
    %155 = vector.broadcast %cst_62 : f32 to vector<1x32xf32>
    %156 = arith.subf %155, %154 : vector<1x32xf32>
    %157 = math.exp %156 : vector<1x32xf32>
    %cst_63 = arith.constant 0.000000e+00 : f32
    %158 = vector.broadcast %cst_63 : f32 to vector<1x32xf32>
    %159 = arith.cmpf oge, %153, %158 : vector<1x32xf32>
    %cst_64 = arith.constant 1.000000e+00 : f32
    %160 = vector.broadcast %cst_64 : f32 to vector<1x32xf32>
    %161 = arith.select %159, %160, %157 : vector<1x32xi1>, vector<1x32xf32>
    %cst_65 = arith.constant 1.000000e+00 : f32
    %162 = vector.broadcast %cst_65 : f32 to vector<1x32xf32>
    %163 = arith.select %159, %157, %162 : vector<1x32xi1>, vector<1x32xf32>
    %164 = arith.mulf %161, %144 : vector<1x32xf32>
    %165 = arith.mulf %163, %151 : vector<1x32xf32>
    %166 = arith.addf %164, %165 : vector<1x32xf32>
    %167 = arith.mulf %161, %146 : vector<1x32xf32>
    %168 = arith.addf %167, %163 : vector<1x32xf32>
    %169 = tpu.reciprocal %168 {approx = true} : vector<1x32xf32> -> vector<1x32xf32>
    %170 = arith.mulf %166, %169 : vector<1x32xf32>
    %171 = arith.index_cast %c2_i32 : i32 to index
    %c0_66 = arith.constant 0 : index
    %172 = vector.load %arg24[%171, %c0_66] : memref<8x32xf32, #tpu.memory_space<vmem>>, vector<1x32xf32>
    tpu.vector_store %arg24[%171, %c0_66], %170 {strides = array<i32>} : memref<8x32xf32, #tpu.memory_space<vmem>>, vector<1x32xf32>,
    %173 = arith.addf %56, %147 : vector<1x32xf32>
    %174 = arith.subf %173, %149 : vector<1x32xf32>
    %175 = math.absf %174 : vector<1x32xf32>
    %cst_67 = arith.constant 0.000000e+00 : f32
    %176 = vector.broadcast %cst_67 : f32 to vector<1x32xf32>
    %177 = arith.subf %176, %175 : vector<1x32xf32>
    %178 = math.exp %177 : vector<1x32xf32>
    %cst_68 = arith.constant 0.000000e+00 : f32
    %179 = vector.broadcast %cst_68 : f32 to vector<1x32xf32>
    %180 = arith.cmpf oge, %174, %179 : vector<1x32xf32>
    %cst_69 = arith.constant 1.000000e+00 : f32
    %181 = vector.broadcast %cst_69 : f32 to vector<1x32xf32>
    %182 = arith.select %180, %181, %178 : vector<1x32xi1>, vector<1x32xf32>
    %cst_70 = arith.constant 1.000000e+00 : f32
    %183 = vector.broadcast %cst_70 : f32 to vector<1x32xf32>
    %184 = arith.select %180, %178, %183 : vector<1x32xi1>, vector<1x32xf32>
    %185 = arith.mulf %182, %144 : vector<1x32xf32>
    %186 = arith.mulf %184, %151 : vector<1x32xf32>
    %187 = arith.addf %185, %186 : vector<1x32xf32>
    %188 = arith.mulf %182, %146 : vector<1x32xf32>
    %189 = arith.addf %188, %184 : vector<1x32xf32>
    %190 = arith.maximumf %173, %149 : vector<1x32xf32>
    %c3_i32 = arith.constant 3 : i32
    %191 = arith.index_cast %c3_i32 : i32 to index
    %c0_71 = arith.constant 0 : index
    %192 = vector.load %arg22[%191, %c0_71] : memref<8x32xf32, #tpu.memory_space<vmem>>, vector<1x32xf32>
    %193 = arith.index_cast %c3_i32 : i32 to index
    %c0_72 = arith.constant 0 : index
    %194 = vector.load %arg23[%193, %c0_72] : memref<8x32xf32, #tpu.memory_space<vmem>>, vector<1x32xf32>
    %195 = arith.addf %58, %192 : vector<1x32xf32>
    %196 = arith.subf %190, %195 : vector<1x32xf32>
    %197 = math.absf %196 : vector<1x32xf32>
    %cst_73 = arith.constant 0.000000e+00 : f32
    %198 = vector.broadcast %cst_73 : f32 to vector<1x32xf32>
    %199 = arith.subf %198, %197 : vector<1x32xf32>
    %200 = math.exp %199 : vector<1x32xf32>
    %cst_74 = arith.constant 0.000000e+00 : f32
    %201 = vector.broadcast %cst_74 : f32 to vector<1x32xf32>
    %202 = arith.cmpf oge, %196, %201 : vector<1x32xf32>
    %cst_75 = arith.constant 1.000000e+00 : f32
    %203 = vector.broadcast %cst_75 : f32 to vector<1x32xf32>
    %204 = arith.select %202, %203, %200 : vector<1x32xi1>, vector<1x32xf32>
    %cst_76 = arith.constant 1.000000e+00 : f32
    %205 = vector.broadcast %cst_76 : f32 to vector<1x32xf32>
    %206 = arith.select %202, %200, %205 : vector<1x32xi1>, vector<1x32xf32>
    %207 = arith.mulf %204, %187 : vector<1x32xf32>
    %208 = arith.mulf %206, %194 : vector<1x32xf32>
    %209 = arith.addf %207, %208 : vector<1x32xf32>
    %210 = arith.mulf %204, %189 : vector<1x32xf32>
    %211 = arith.addf %210, %206 : vector<1x32xf32>
    %212 = tpu.reciprocal %211 {approx = true} : vector<1x32xf32> -> vector<1x32xf32>
    %213 = arith.mulf %209, %212 : vector<1x32xf32>
    %214 = arith.index_cast %c3_i32 : i32 to index
    %c0_77 = arith.constant 0 : index
    %215 = vector.load %arg24[%214, %c0_77] : memref<8x32xf32, #tpu.memory_space<vmem>>, vector<1x32xf32>
    tpu.vector_store %arg24[%214, %c0_77], %213 {strides = array<i32>} : memref<8x32xf32, #tpu.memory_space<vmem>>, vector<1x32xf32>,
    %216 = arith.addf %56, %190 : vector<1x32xf32>
    %217 = arith.subf %216, %192 : vector<1x32xf32>
    %218 = math.absf %217 : vector<1x32xf32>
    %cst_78 = arith.constant 0.000000e+00 : f32
    %219 = vector.broadcast %cst_78 : f32 to vector<1x32xf32>
    %220 = arith.subf %219, %218 : vector<1x32xf32>
    %221 = math.exp %220 : vector<1x32xf32>
    %cst_79 = arith.constant 0.000000e+00 : f32
    %222 = vector.broadcast %cst_79 : f32 to vector<1x32xf32>
    %223 = arith.cmpf oge, %217, %222 : vector<1x32xf32>
    %cst_80 = arith.constant 1.000000e+00 : f32
    %224 = vector.broadcast %cst_80 : f32 to vector<1x32xf32>
    %225 = arith.select %223, %224, %221 : vector<1x32xi1>, vector<1x32xf32>
    %cst_81 = arith.constant 1.000000e+00 : f32
    %226 = vector.broadcast %cst_81 : f32 to vector<1x32xf32>
    %227 = arith.select %223, %221, %226 : vector<1x32xi1>, vector<1x32xf32>
    %228 = arith.mulf %225, %187 : vector<1x32xf32>
    %229 = arith.mulf %227, %194 : vector<1x32xf32>
    %230 = arith.addf %228, %229 : vector<1x32xf32>
    %231 = arith.mulf %225, %189 : vector<1x32xf32>
    %232 = arith.addf %231, %227 : vector<1x32xf32>
    %233 = arith.maximumf %216, %192 : vector<1x32xf32>
    %c4_i32 = arith.constant 4 : i32
    %234 = arith.index_cast %c4_i32 : i32 to index
    %c0_82 = arith.constant 0 : index
    %235 = vector.load %arg22[%234, %c0_82] : memref<8x32xf32, #tpu.memory_space<vmem>>, vector<1x32xf32>
    %236 = arith.index_cast %c4_i32 : i32 to index
    %c0_83 = arith.constant 0 : index
    %237 = vector.load %arg23[%236, %c0_83] : memref<8x32xf32, #tpu.memory_space<vmem>>, vector<1x32xf32>
    %238 = arith.addf %58, %235 : vector<1x32xf32>
    %239 = arith.subf %233, %238 : vector<1x32xf32>
    %240 = math.absf %239 : vector<1x32xf32>
    %cst_84 = arith.constant 0.000000e+00 : f32
    %241 = vector.broadcast %cst_84 : f32 to vector<1x32xf32>
    %242 = arith.subf %241, %240 : vector<1x32xf32>
    %243 = math.exp %242 : vector<1x32xf32>
    %cst_85 = arith.constant 0.000000e+00 : f32
    %244 = vector.broadcast %cst_85 : f32 to vector<1x32xf32>
    %245 = arith.cmpf oge, %239, %244 : vector<1x32xf32>
    %cst_86 = arith.constant 1.000000e+00 : f32
    %246 = vector.broadcast %cst_86 : f32 to vector<1x32xf32>
    %247 = arith.select %245, %246, %243 : vector<1x32xi1>, vector<1x32xf32>
    %cst_87 = arith.constant 1.000000e+00 : f32
    %248 = vector.broadcast %cst_87 : f32 to vector<1x32xf32>
    %249 = arith.select %245, %243, %248 : vector<1x32xi1>, vector<1x32xf32>
    %250 = arith.mulf %247, %230 : vector<1x32xf32>
    %251 = arith.mulf %249, %237 : vector<1x32xf32>
    %252 = arith.addf %250, %251 : vector<1x32xf32>
    %253 = arith.mulf %247, %232 : vector<1x32xf32>
    %254 = arith.addf %253, %249 : vector<1x32xf32>
    %255 = tpu.reciprocal %254 {approx = true} : vector<1x32xf32> -> vector<1x32xf32>
    %256 = arith.mulf %252, %255 : vector<1x32xf32>
    %257 = arith.index_cast %c4_i32 : i32 to index
    %c0_88 = arith.constant 0 : index
    %258 = vector.load %arg24[%257, %c0_88] : memref<8x32xf32, #tpu.memory_space<vmem>>, vector<1x32xf32>
    tpu.vector_store %arg24[%257, %c0_88], %256 {strides = array<i32>} : memref<8x32xf32, #tpu.memory_space<vmem>>, vector<1x32xf32>,
    %259 = arith.addf %56, %233 : vector<1x32xf32>
    %260 = arith.subf %259, %235 : vector<1x32xf32>
    %261 = math.absf %260 : vector<1x32xf32>
    %cst_89 = arith.constant 0.000000e+00 : f32
    %262 = vector.broadcast %cst_89 : f32 to vector<1x32xf32>
    %263 = arith.subf %262, %261 : vector<1x32xf32>
    %264 = math.exp %263 : vector<1x32xf32>
    %cst_90 = arith.constant 0.000000e+00 : f32
    %265 = vector.broadcast %cst_90 : f32 to vector<1x32xf32>
    %266 = arith.cmpf oge, %260, %265 : vector<1x32xf32>
    %cst_91 = arith.constant 1.000000e+00 : f32
    %267 = vector.broadcast %cst_91 : f32 to vector<1x32xf32>
    %268 = arith.select %266, %267, %264 : vector<1x32xi1>, vector<1x32xf32>
    %cst_92 = arith.constant 1.000000e+00 : f32
    %269 = vector.broadcast %cst_92 : f32 to vector<1x32xf32>
    %270 = arith.select %266, %264, %269 : vector<1x32xi1>, vector<1x32xf32>
    %271 = arith.mulf %268, %230 : vector<1x32xf32>
    %272 = arith.mulf %270, %237 : vector<1x32xf32>
    %273 = arith.addf %271, %272 : vector<1x32xf32>
    %274 = arith.mulf %268, %232 : vector<1x32xf32>
    %275 = arith.addf %274, %270 : vector<1x32xf32>
    %276 = arith.maximumf %259, %235 : vector<1x32xf32>
    %c5_i32 = arith.constant 5 : i32
    %277 = arith.index_cast %c5_i32 : i32 to index
    %c0_93 = arith.constant 0 : index
    %278 = vector.load %arg22[%277, %c0_93] : memref<8x32xf32, #tpu.memory_space<vmem>>, vector<1x32xf32>
    %279 = arith.index_cast %c5_i32 : i32 to index
    %c0_94 = arith.constant 0 : index
    %280 = vector.load %arg23[%279, %c0_94] : memref<8x32xf32, #tpu.memory_space<vmem>>, vector<1x32xf32>
    %281 = arith.addf %58, %278 : vector<1x32xf32>
    %282 = arith.subf %276, %281 : vector<1x32xf32>
    %283 = math.absf %282 : vector<1x32xf32>
    %cst_95 = arith.constant 0.000000e+00 : f32
    %284 = vector.broadcast %cst_95 : f32 to vector<1x32xf32>
    %285 = arith.subf %284, %283 : vector<1x32xf32>
    %286 = math.exp %285 : vector<1x32xf32>
    %cst_96 = arith.constant 0.000000e+00 : f32
    %287 = vector.broadcast %cst_96 : f32 to vector<1x32xf32>
    %288 = arith.cmpf oge, %282, %287 : vector<1x32xf32>
    %cst_97 = arith.constant 1.000000e+00 : f32
    %289 = vector.broadcast %cst_97 : f32 to vector<1x32xf32>
    %290 = arith.select %288, %289, %286 : vector<1x32xi1>, vector<1x32xf32>
    %cst_98 = arith.constant 1.000000e+00 : f32
    %291 = vector.broadcast %cst_98 : f32 to vector<1x32xf32>
    %292 = arith.select %288, %286, %291 : vector<1x32xi1>, vector<1x32xf32>
    %293 = arith.mulf %290, %273 : vector<1x32xf32>
    %294 = arith.mulf %292, %280 : vector<1x32xf32>
    %295 = arith.addf %293, %294 : vector<1x32xf32>
    %296 = arith.mulf %290, %275 : vector<1x32xf32>
    %297 = arith.addf %296, %292 : vector<1x32xf32>
    %298 = tpu.reciprocal %297 {approx = true} : vector<1x32xf32> -> vector<1x32xf32>
    %299 = arith.mulf %295, %298 : vector<1x32xf32>
    %300 = arith.index_cast %c5_i32 : i32 to index
    %c0_99 = arith.constant 0 : index
    %301 = vector.load %arg24[%300, %c0_99] : memref<8x32xf32, #tpu.memory_space<vmem>>, vector<1x32xf32>
    tpu.vector_store %arg24[%300, %c0_99], %299 {strides = array<i32>} : memref<8x32xf32, #tpu.memory_space<vmem>>, vector<1x32xf32>,
    %302 = arith.addf %56, %276 : vector<1x32xf32>
    %303 = arith.subf %302, %278 : vector<1x32xf32>
    %304 = math.absf %303 : vector<1x32xf32>
    %cst_100 = arith.constant 0.000000e+00 : f32
    %305 = vector.broadcast %cst_100 : f32 to vector<1x32xf32>
    %306 = arith.subf %305, %304 : vector<1x32xf32>
    %307 = math.exp %306 : vector<1x32xf32>
    %cst_101 = arith.constant 0.000000e+00 : f32
    %308 = vector.broadcast %cst_101 : f32 to vector<1x32xf32>
    %309 = arith.cmpf oge, %303, %308 : vector<1x32xf32>
    %cst_102 = arith.constant 1.000000e+00 : f32
    %310 = vector.broadcast %cst_102 : f32 to vector<1x32xf32>
    %311 = arith.select %309, %310, %307 : vector<1x32xi1>, vector<1x32xf32>
    %cst_103 = arith.constant 1.000000e+00 : f32
    %312 = vector.broadcast %cst_103 : f32 to vector<1x32xf32>
    %313 = arith.select %309, %307, %312 : vector<1x32xi1>, vector<1x32xf32>
    %314 = arith.mulf %311, %273 : vector<1x32xf32>
    %315 = arith.mulf %313, %280 : vector<1x32xf32>
    %316 = arith.addf %314, %315 : vector<1x32xf32>
    %317 = arith.mulf %311, %275 : vector<1x32xf32>
    %318 = arith.addf %317, %313 : vector<1x32xf32>
    %319 = arith.maximumf %302, %278 : vector<1x32xf32>
    %c6_i32 = arith.constant 6 : i32
    %320 = arith.index_cast %c6_i32 : i32 to index
    %c0_104 = arith.constant 0 : index
    %321 = vector.load %arg22[%320, %c0_104] : memref<8x32xf32, #tpu.memory_space<vmem>>, vector<1x32xf32>
    %322 = arith.index_cast %c6_i32 : i32 to index
    %c0_105 = arith.constant 0 : index
    %323 = vector.load %arg23[%322, %c0_105] : memref<8x32xf32, #tpu.memory_space<vmem>>, vector<1x32xf32>
    %324 = arith.addf %58, %321 : vector<1x32xf32>
    %325 = arith.subf %319, %324 : vector<1x32xf32>
    %326 = math.absf %325 : vector<1x32xf32>
    %cst_106 = arith.constant 0.000000e+00 : f32
    %327 = vector.broadcast %cst_106 : f32 to vector<1x32xf32>
    %328 = arith.subf %327, %326 : vector<1x32xf32>
    %329 = math.exp %328 : vector<1x32xf32>
    %cst_107 = arith.constant 0.000000e+00 : f32
    %330 = vector.broadcast %cst_107 : f32 to vector<1x32xf32>
    %331 = arith.cmpf oge, %325, %330 : vector<1x32xf32>
    %cst_108 = arith.constant 1.000000e+00 : f32
    %332 = vector.broadcast %cst_108 : f32 to vector<1x32xf32>
    %333 = arith.select %331, %332, %329 : vector<1x32xi1>, vector<1x32xf32>
    %cst_109 = arith.constant 1.000000e+00 : f32
    %334 = vector.broadcast %cst_109 : f32 to vector<1x32xf32>
    %335 = arith.select %331, %329, %334 : vector<1x32xi1>, vector<1x32xf32>
    %336 = arith.mulf %333, %316 : vector<1x32xf32>
    %337 = arith.mulf %335, %323 : vector<1x32xf32>
    %338 = arith.addf %336, %337 : vector<1x32xf32>
    %339 = arith.mulf %333, %318 : vector<1x32xf32>
    %340 = arith.addf %339, %335 : vector<1x32xf32>
    %341 = tpu.reciprocal %340 {approx = true} : vector<1x32xf32> -> vector<1x32xf32>
    %342 = arith.mulf %338, %341 : vector<1x32xf32>
    %343 = arith.index_cast %c6_i32 : i32 to index
    %c0_110 = arith.constant 0 : index
    %344 = vector.load %arg24[%343, %c0_110] : memref<8x32xf32, #tpu.memory_space<vmem>>, vector<1x32xf32>
    tpu.vector_store %arg24[%343, %c0_110], %342 {strides = array<i32>} : memref<8x32xf32, #tpu.memory_space<vmem>>, vector<1x32xf32>,
    %345 = arith.addf %56, %319 : vector<1x32xf32>
    %346 = arith.subf %345, %321 : vector<1x32xf32>
    %347 = math.absf %346 : vector<1x32xf32>
    %cst_111 = arith.constant 0.000000e+00 : f32
    %348 = vector.broadcast %cst_111 : f32 to vector<1x32xf32>
    %349 = arith.subf %348, %347 : vector<1x32xf32>
    %350 = math.exp %349 : vector<1x32xf32>
    %cst_112 = arith.constant 0.000000e+00 : f32
    %351 = vector.broadcast %cst_112 : f32 to vector<1x32xf32>
    %352 = arith.cmpf oge, %346, %351 : vector<1x32xf32>
    %cst_113 = arith.constant 1.000000e+00 : f32
    %353 = vector.broadcast %cst_113 : f32 to vector<1x32xf32>
    %354 = arith.select %352, %353, %350 : vector<1x32xi1>, vector<1x32xf32>
    %cst_114 = arith.constant 1.000000e+00 : f32
    %355 = vector.broadcast %cst_114 : f32 to vector<1x32xf32>
    %356 = arith.select %352, %350, %355 : vector<1x32xi1>, vector<1x32xf32>
    %357 = arith.mulf %354, %316 : vector<1x32xf32>
    %358 = arith.mulf %356, %323 : vector<1x32xf32>
    %359 = arith.addf %357, %358 : vector<1x32xf32>
    %360 = arith.mulf %354, %318 : vector<1x32xf32>
    %361 = arith.addf %360, %356 : vector<1x32xf32>
    %362 = arith.maximumf %345, %321 : vector<1x32xf32>
    %c7_i32 = arith.constant 7 : i32
    %363 = arith.index_cast %c7_i32 : i32 to index
    %c0_115 = arith.constant 0 : index
    %364 = vector.load %arg22[%363, %c0_115] : memref<8x32xf32, #tpu.memory_space<vmem>>, vector<1x32xf32>
    %365 = arith.index_cast %c7_i32 : i32 to index
    %c0_116 = arith.constant 0 : index
    %366 = vector.load %arg23[%365, %c0_116] : memref<8x32xf32, #tpu.memory_space<vmem>>, vector<1x32xf32>
    %367 = arith.addf %58, %364 : vector<1x32xf32>
    %368 = arith.subf %362, %367 : vector<1x32xf32>
    %369 = math.absf %368 : vector<1x32xf32>
    %cst_117 = arith.constant 0.000000e+00 : f32
    %370 = vector.broadcast %cst_117 : f32 to vector<1x32xf32>
    %371 = arith.subf %370, %369 : vector<1x32xf32>
    %372 = math.exp %371 : vector<1x32xf32>
    %cst_118 = arith.constant 0.000000e+00 : f32
    %373 = vector.broadcast %cst_118 : f32 to vector<1x32xf32>
    %374 = arith.cmpf oge, %368, %373 : vector<1x32xf32>
    %cst_119 = arith.constant 1.000000e+00 : f32
    %375 = vector.broadcast %cst_119 : f32 to vector<1x32xf32>
    %376 = arith.select %374, %375, %372 : vector<1x32xi1>, vector<1x32xf32>
    %cst_120 = arith.constant 1.000000e+00 : f32
    %377 = vector.broadcast %cst_120 : f32 to vector<1x32xf32>
    %378 = arith.select %374, %372, %377 : vector<1x32xi1>, vector<1x32xf32>
    %379 = arith.mulf %376, %359 : vector<1x32xf32>
    %380 = arith.mulf %378, %366 : vector<1x32xf32>
    %381 = arith.addf %379, %380 : vector<1x32xf32>
    %382 = arith.mulf %376, %361 : vector<1x32xf32>
    %383 = arith.addf %382, %378 : vector<1x32xf32>
    %384 = tpu.reciprocal %383 {approx = true} : vector<1x32xf32> -> vector<1x32xf32>
    %385 = arith.mulf %381, %384 : vector<1x32xf32>
    %386 = arith.index_cast %c7_i32 : i32 to index
    %c0_121 = arith.constant 0 : index
    %387 = vector.load %arg24[%386, %c0_121] : memref<8x32xf32, #tpu.memory_space<vmem>>, vector<1x32xf32>
    tpu.vector_store %arg24[%386, %c0_121], %385 {strides = array<i32>} : memref<8x32xf32, #tpu.memory_space<vmem>>, vector<1x32xf32>,
    %388 = arith.addf %56, %362 : vector<1x32xf32>
    %389 = arith.subf %388, %364 : vector<1x32xf32>
    %390 = math.absf %389 : vector<1x32xf32>
    %cst_122 = arith.constant 0.000000e+00 : f32
    %391 = vector.broadcast %cst_122 : f32 to vector<1x32xf32>
    %392 = arith.subf %391, %390 : vector<1x32xf32>
    %393 = math.exp %392 : vector<1x32xf32>
    %cst_123 = arith.constant 0.000000e+00 : f32
    %394 = vector.broadcast %cst_123 : f32 to vector<1x32xf32>
    %395 = arith.cmpf oge, %389, %394 : vector<1x32xf32>
    %cst_124 = arith.constant 1.000000e+00 : f32
    %396 = vector.broadcast %cst_124 : f32 to vector<1x32xf32>
    %397 = arith.select %395, %396, %393 : vector<1x32xi1>, vector<1x32xf32>
    %cst_125 = arith.constant 1.000000e+00 : f32
    %398 = vector.broadcast %cst_125 : f32 to vector<1x32xf32>
    %399 = arith.select %395, %393, %398 : vector<1x32xi1>, vector<1x32xf32>
    %400 = arith.mulf %397, %359 : vector<1x32xf32>
    %401 = arith.mulf %399, %366 : vector<1x32xf32>
    %402 = arith.addf %400, %401 : vector<1x32xf32>
    %403 = arith.mulf %397, %361 : vector<1x32xf32>
    %404 = arith.addf %403, %399 : vector<1x32xf32>
    %405 = arith.maximumf %388, %364 : vector<1x32xf32>
    %c8_i32 = arith.constant 8 : i32
    %c0_126 = arith.constant 0 : index
    %c0_127 = arith.constant 0 : index
    %406 = vector.load %arg24[%c0_126, %c0_127] : memref<8x32xf32, #tpu.memory_space<vmem>>, vector<8x32xf32>
    %407 = arith.mulf %54, %406 : vector<8x32xf32>
    %408 = arith.truncf %407 : vector<8x32xf32> to vector<8x32xbf16>
    %c0_128 = arith.constant 0 : index
    %c0_129 = arith.constant 0 : index
    %c0_130 = arith.constant 0 : index
    %409 = vector.load %arg11[%c0_128, %c0_129, %c0_130] : memref<1x32x32xbf16, #tpu.memory_space<vmem>>, vector<1x32x32xbf16>
    %410 = vector.shape_cast %409 : vector<1x32x32xbf16> to vector<32x32xbf16>
    %cst_131 = arith.constant dense<0.000000e+00> : vector<8x32xf32>
    %411 = tpu.matmul %408, %410, %cst_131 {dimension_numbers = #tpu.dot_dimension_numbers<[1], [0], [0], [1], [0, 0, 1, 1], [], []>} : vector<8x32xbf16>, vector<32x32xbf16>, vector<8x32xf32> -> vector<8x32xf32>
    %412 = arith.addf %3, %411 : vector<8x32xf32>
    %c0_132 = arith.constant 0 : index
    %c0_133 = arith.constant 0 : index
    %c0_134 = arith.constant 0 : index
    %413 = vector.load %arg12[%c0_132, %c0_133, %c0_134] : memref<1x1x32xf32, #tpu.memory_space<vmem>>, vector<1x1x32xf32>
    %414 = vector.shape_cast %413 : vector<1x1x32xf32> to vector<1x32xf32>
    %c0_135 = arith.constant 0 : index
    %c0_136 = arith.constant 0 : index
    %c0_137 = arith.constant 0 : index
    %415 = vector.load %arg13[%c0_135, %c0_136, %c0_137] : memref<1x1x32xf32, #tpu.memory_space<vmem>>, vector<1x1x32xf32>
    %416 = vector.shape_cast %415 : vector<1x1x32xf32> to vector<1x32xf32>
    %cst_138 = arith.constant dense<0.000000e+00> : vector<8xf32>
    %417 = vector.multi_reduction <add>, %412, %cst_138 [1] : vector<8x32xf32> to vector<8xf32>
    %418 = vector.shape_cast %417 : vector<8xf32> to vector<8x1xf32>
    %cst_139 = arith.constant 3.200000e+01 : f32
    %419 = vector.broadcast %cst_139 : f32 to vector<8x1xf32>
    %420 = arith.divf %418, %419 : vector<8x1xf32>
    %421 = vector.broadcast %420 : vector<8x1xf32> to vector<8x32xf32>
    %422 = arith.subf %412, %421 : vector<8x32xf32>
    %423 = arith.mulf %422, %422 : vector<8x32xf32>
    %cst_140 = arith.constant dense<0.000000e+00> : vector<8xf32>
    %424 = vector.multi_reduction <add>, %423, %cst_140 [1] : vector<8x32xf32> to vector<8xf32>
    %425 = vector.shape_cast %424 : vector<8xf32> to vector<8x1xf32>
    %cst_141 = arith.constant 3.200000e+01 : f32
    %426 = vector.broadcast %cst_141 : f32 to vector<8x1xf32>
    %427 = arith.divf %425, %426 : vector<8x1xf32>
    %428 = vector.broadcast %420 : vector<8x1xf32> to vector<8x32xf32>
    %429 = arith.subf %412, %428 : vector<8x32xf32>
    %cst_142 = arith.constant 9.99999974E-6 : f32
    %430 = vector.broadcast %cst_142 : f32 to vector<8x1xf32>
    %431 = arith.addf %427, %430 : vector<8x1xf32>
    %432 = math.rsqrt %431 : vector<8x1xf32>
    %433 = vector.broadcast %432 : vector<8x1xf32> to vector<8x32xf32>
    %434 = arith.mulf %429, %433 : vector<8x32xf32>
    %435 = vector.broadcast %414 : vector<1x32xf32> to vector<8x32xf32>
    %436 = arith.mulf %434, %435 : vector<8x32xf32>
    %437 = vector.broadcast %416 : vector<1x32xf32> to vector<8x32xf32>
    %438 = arith.addf %436, %437 : vector<8x32xf32>
    %c1_i32_143 = arith.constant 1 : i32
    %439 = tpu.dynamic_rotate %438 by %c1_i32_143 dim 0 : vector<8x32xf32>, i32 -> vector<8x32xf32>
    %cst_144 = arith.constant 0.000000e+00 : f32
    %440 = vector.broadcast %cst_144 : f32 to vector<8x32xf32>
    %441 = arith.select %6, %440, %439 : vector<8x32xi1>, vector<8x32xf32>
    %442 = arith.truncf %438 : vector<8x32xf32> to vector<8x32xbf16>
    %c0_145 = arith.constant 0 : index
    %c0_146 = arith.constant 0 : index
    %c0_147 = arith.constant 0 : index
    %443 = vector.load %arg14[%c0_145, %c0_146, %c0_147] : memref<1x32x160xbf16, #tpu.memory_space<vmem>>, vector<1x32x160xbf16>
    %444 = vector.shape_cast %443 : vector<1x32x160xbf16> to vector<32x160xbf16>
    %cst_148 = arith.constant dense<0.000000e+00> : vector<8x160xf32>
    %445 = tpu.matmul %442, %444, %cst_148 {dimension_numbers = #tpu.dot_dimension_numbers<[1], [0], [0], [1], [0, 0, 1, 1], [], []>} : vector<8x32xbf16>, vector<32x160xbf16>, vector<8x160xf32> -> vector<8x160xf32>
    %446 = arith.truncf %441 : vector<8x32xf32> to vector<8x32xbf16>
    %c0_149 = arith.constant 0 : index
    %c0_150 = arith.constant 0 : index
    %c0_151 = arith.constant 0 : index
    %447 = vector.load %arg15[%c0_149, %c0_150, %c0_151] : memref<1x32x160xbf16, #tpu.memory_space<vmem>>, vector<1x32x160xbf16>
    %448 = vector.shape_cast %447 : vector<1x32x160xbf16> to vector<32x160xbf16>
    %cst_152 = arith.constant dense<0.000000e+00> : vector<8x160xf32>
    %449 = tpu.matmul %446, %448, %cst_152 {dimension_numbers = #tpu.dot_dimension_numbers<[1], [0], [0], [1], [0, 0, 1, 1], [], []>} : vector<8x32xbf16>, vector<32x160xbf16>, vector<8x160xf32> -> vector<8x160xf32>
    %450 = arith.addf %445, %449 : vector<8x160xf32>
    %451 = vector.extract_strided_slice %450 {offsets = [0, 0], sizes = [8, 128], strides = [1, 1]} : vector<8x160xf32> to vector<8x128xf32>
    %cst_153 = arith.constant 0.000000e+00 : f32
    %452 = vector.broadcast %cst_153 : f32 to vector<8x128xf32>
    %453 = arith.maximumf %451, %452 : vector<8x128xf32>
    %454 = arith.mulf %453, %453 : vector<8x128xf32>
    %455 = vector.extract_strided_slice %450 {offsets = [0, 128], sizes = [8, 32], strides = [1, 1]} : vector<8x160xf32> to vector<8x32xf32>
    %456 = arith.negf %455 : vector<8x32xf32>
    %457 = math.exp %456 : vector<8x32xf32>
    %cst_154 = arith.constant 1.000000e+00 : f32
    %458 = vector.broadcast %cst_154 : f32 to vector<8x32xf32>
    %459 = arith.addf %458, %457 : vector<8x32xf32>
    %460 = arith.divf %458, %459 : vector<8x32xf32>
    %461 = arith.truncf %454 : vector<8x128xf32> to vector<8x128xbf16>
    %c0_155 = arith.constant 0 : index
    %c0_156 = arith.constant 0 : index
    %c0_157 = arith.constant 0 : index
    %462 = vector.load %arg16[%c0_155, %c0_156, %c0_157] : memref<1x128x32xbf16, #tpu.memory_space<vmem>>, vector<1x128x32xbf16>
    %463 = vector.shape_cast %462 : vector<1x128x32xbf16> to vector<128x32xbf16>
    %cst_158 = arith.constant dense<0.000000e+00> : vector<8x32xf32>
    %464 = tpu.matmul %461, %463, %cst_158 {dimension_numbers = #tpu.dot_dimension_numbers<[1], [0], [0], [1], [0, 0, 1, 1], [], []>} : vector<8x128xbf16>, vector<128x32xbf16>, vector<8x32xf32> -> vector<8x32xf32>
    %465 = arith.mulf %460, %464 : vector<8x32xf32>
    %466 = arith.addf %412, %465 : vector<8x32xf32>
    %c0_159 = arith.constant 0 : index
    %c0_160 = arith.constant 0 : index
    %467 = vector.load %arg21[%c0_159, %c0_160] : memref<8x32xf32, #tpu.memory_space<vmem>>, vector<8x32xf32>
    tpu.vector_store %arg21[%c0_159, %c0_160], %466 {strides = array<i32>} : memref<8x32xf32, #tpu.memory_space<vmem>>, vector<8x32xf32>,
    %c1_i32_161 = arith.constant 1 : i32
    %468 = arith.cmpi eq, %arg1, %c1_i32_161 : i32
    %469 = arith.extui %468 : i1 to i32
    %c0_i32_162 = arith.constant 0 : i32
    %470 = arith.cmpi ne, %469, %c0_i32_162 : i32
    scf.if %470 {
      %c0_163 = arith.constant 0 : index
      %c0_164 = arith.constant 0 : index
      %471 = vector.load %arg17[%c0_163, %c0_164] : memref<1x32xf32, #tpu.memory_space<vmem>>, vector<1x32xf32>
      %c0_165 = arith.constant 0 : index
      %c0_166 = arith.constant 0 : index
      %472 = vector.load %arg18[%c0_165, %c0_166] : memref<1x32xf32, #tpu.memory_space<vmem>>, vector<1x32xf32>
      %cst_167 = arith.constant dense<0.000000e+00> : vector<8xf32>
      %473 = vector.multi_reduction <add>, %466, %cst_167 [1] : vector<8x32xf32> to vector<8xf32>
      %474 = vector.shape_cast %473 : vector<8xf32> to vector<8x1xf32>
      %cst_168 = arith.constant 3.200000e+01 : f32
      %475 = vector.broadcast %cst_168 : f32 to vector<8x1xf32>
      %476 = arith.divf %474, %475 : vector<8x1xf32>
      %477 = vector.broadcast %476 : vector<8x1xf32> to vector<8x32xf32>
      %478 = arith.subf %466, %477 : vector<8x32xf32>
      %479 = arith.mulf %478, %478 : vector<8x32xf32>
      %cst_169 = arith.constant dense<0.000000e+00> : vector<8xf32>
      %480 = vector.multi_reduction <add>, %479, %cst_169 [1] : vector<8x32xf32> to vector<8xf32>
      %481 = vector.shape_cast %480 : vector<8xf32> to vector<8x1xf32>
      %cst_170 = arith.constant 3.200000e+01 : f32
      %482 = vector.broadcast %cst_170 : f32 to vector<8x1xf32>
      %483 = arith.divf %481, %482 : vector<8x1xf32>
      %484 = vector.broadcast %476 : vector<8x1xf32> to vector<8x32xf32>
      %485 = arith.subf %466, %484 : vector<8x32xf32>
      %cst_171 = arith.constant 9.99999974E-6 : f32
      %486 = vector.broadcast %cst_171 : f32 to vector<8x1xf32>
      %487 = arith.addf %483, %486 : vector<8x1xf32>
      %488 = math.rsqrt %487 : vector<8x1xf32>
      %489 = vector.broadcast %488 : vector<8x1xf32> to vector<8x32xf32>
      %490 = arith.mulf %485, %489 : vector<8x32xf32>
      %491 = vector.broadcast %471 : vector<1x32xf32> to vector<8x32xf32>
      %492 = arith.mulf %490, %491 : vector<8x32xf32>
      %493 = vector.broadcast %472 : vector<1x32xf32> to vector<8x32xf32>
      %494 = arith.addf %492, %493 : vector<8x32xf32>
      %495 = arith.truncf %494 : vector<8x32xf32> to vector<8x32xbf16>
      %c0_172 = arith.constant 0 : index
      %c0_173 = arith.constant 0 : index
      %496 = vector.load %arg19[%c0_172, %c0_173] : memref<32x128xbf16, #tpu.memory_space<vmem>>, vector<32x128xbf16>
      %cst_174 = arith.constant dense<0.000000e+00> : vector<8x128xf32>
      %497 = tpu.matmul %495, %496, %cst_174 {dimension_numbers = #tpu.dot_dimension_numbers<[1], [0], [0], [1], [0, 0, 1, 1], [], []>} : vector<8x32xbf16>, vector<32x128xbf16>, vector<8x128xf32> -> vector<8x128xf32>
      %c0_175 = arith.constant 0 : index
      %c0_176 = arith.constant 0 : index
      %498 = vector.load %arg20[%c0_175, %c0_176] : memref<8x128xf32, #tpu.memory_space<vmem>>, vector<8x128xf32>
      tpu.vector_store %arg20[%c0_175, %c0_176], %497 {strides = array<i32>} : memref<8x128xf32, #tpu.memory_space<vmem>>, vector<8x128xf32>,
    } else {
    }
    return
  }
  func.func @transform_0(%arg0: i32, %arg1: i32) -> (i32, i32) {
    %c0_i32 = arith.constant 0 : i32
    %c0_i32_0 = arith.constant 0 : i32
    return %arg0, %c0_i32 : i32, i32
  }
  func.func @transform_1(%arg0: i32, %arg1: i32) -> (i32, i32) {
    %c0_i32 = arith.constant 0 : i32
    %c0_i32_0 = arith.constant 0 : i32
    %c0_i32_1 = arith.constant 0 : i32
    return %c0_i32, %c0_i32_0 : i32, i32
  }
  func.func @transform_2(%arg0: i32, %arg1: i32) -> (i32, i32) {
    %c0_i32 = arith.constant 0 : i32
    %c0_i32_0 = arith.constant 0 : i32
    %c0_i32_1 = arith.constant 0 : i32
    return %c0_i32, %c0_i32_0 : i32, i32
  }
  func.func @transform_3(%arg0: i32, %arg1: i32) -> (i32, i32, i32) {
    %c0_i32 = arith.constant 0 : i32
    %c0_i32_0 = arith.constant 0 : i32
    %c0_i32_1 = arith.constant 0 : i32
    return %arg1, %c0_i32, %c0_i32_0 : i32, i32, i32
  }
  func.func @transform_4(%arg0: i32, %arg1: i32) -> (i32, i32, i32) {
    %c0_i32 = arith.constant 0 : i32
    %c0_i32_0 = arith.constant 0 : i32
    %c0_i32_1 = arith.constant 0 : i32
    return %arg1, %c0_i32, %c0_i32_0 : i32, i32, i32
  }
  func.func @transform_5(%arg0: i32, %arg1: i32) -> (i32, i32, i32) {
    %c0_i32 = arith.constant 0 : i32
    %c0_i32_0 = arith.constant 0 : i32
    %c0_i32_1 = arith.constant 0 : i32
    return %arg1, %c0_i32, %c0_i32_0 : i32, i32, i32
  }
  func.func @transform_6(%arg0: i32, %arg1: i32) -> (i32, i32, i32) {
    %c0_i32 = arith.constant 0 : i32
    %c0_i32_0 = arith.constant 0 : i32
    %c0_i32_1 = arith.constant 0 : i32
    return %arg1, %c0_i32, %c0_i32_0 : i32, i32, i32
  }
  func.func @transform_7(%arg0: i32, %arg1: i32) -> (i32, i32, i32) {
    %c0_i32 = arith.constant 0 : i32
    %c0_i32_0 = arith.constant 0 : i32
    %c0_i32_1 = arith.constant 0 : i32
    return %arg1, %c0_i32, %c0_i32_0 : i32, i32, i32
  }
  func.func @transform_8(%arg0: i32, %arg1: i32) -> (i32, i32, i32) {
    %c0_i32 = arith.constant 0 : i32
    %c0_i32_0 = arith.constant 0 : i32
    %c0_i32_1 = arith.constant 0 : i32
    return %arg1, %c0_i32, %c0_i32_0 : i32, i32, i32
  }
  func.func @transform_9(%arg0: i32, %arg1: i32) -> (i32, i32, i32) {
    %c0_i32 = arith.constant 0 : i32
    %c0_i32_0 = arith.constant 0 : i32
    %c0_i32_1 = arith.constant 0 : i32
    return %arg1, %c0_i32, %c0_i32_0 : i32, i32, i32
  }
  func.func @transform_10(%arg0: i32, %arg1: i32) -> (i32, i32, i32) {
    %c0_i32 = arith.constant 0 : i32
    %c0_i32_0 = arith.constant 0 : i32
    %c0_i32_1 = arith.constant 0 : i32
    return %arg1, %c0_i32, %c0_i32_0 : i32, i32, i32
  }
  func.func @transform_11(%arg0: i32, %arg1: i32) -> (i32, i32, i32) {
    %c0_i32 = arith.constant 0 : i32
    %c0_i32_0 = arith.constant 0 : i32
    %c0_i32_1 = arith.constant 0 : i32
    return %arg1, %c0_i32, %c0_i32_0 : i32, i32, i32
  }
  func.func @transform_12(%arg0: i32, %arg1: i32) -> (i32, i32, i32) {
    %c0_i32 = arith.constant 0 : i32
    %c0_i32_0 = arith.constant 0 : i32
    %c0_i32_1 = arith.constant 0 : i32
    return %arg1, %c0_i32, %c0_i32_0 : i32, i32, i32
  }
  func.func @transform_13(%arg0: i32, %arg1: i32) -> (i32, i32, i32) {
    %c0_i32 = arith.constant 0 : i32
    %c0_i32_0 = arith.constant 0 : i32
    %c0_i32_1 = arith.constant 0 : i32
    return %arg1, %c0_i32, %c0_i32_0 : i32, i32, i32
  }
  func.func @transform_14(%arg0: i32, %arg1: i32) -> (i32, i32, i32) {
    %c0_i32 = arith.constant 0 : i32
    %c0_i32_0 = arith.constant 0 : i32
    %c0_i32_1 = arith.constant 0 : i32
    return %arg1, %c0_i32, %c0_i32_0 : i32, i32, i32
  }
  func.func @transform_15(%arg0: i32, %arg1: i32) -> (i32, i32) {
    %c0_i32 = arith.constant 0 : i32
    %c0_i32_0 = arith.constant 0 : i32
    %c0_i32_1 = arith.constant 0 : i32
    return %c0_i32, %c0_i32_0 : i32, i32
  }
  func.func @transform_16(%arg0: i32, %arg1: i32) -> (i32, i32) {
    %c0_i32 = arith.constant 0 : i32
    %c0_i32_0 = arith.constant 0 : i32
    %c0_i32_1 = arith.constant 0 : i32
    return %c0_i32, %c0_i32_0 : i32, i32
  }
  func.func @transform_17(%arg0: i32, %arg1: i32) -> (i32, i32) {
    %c0_i32 = arith.constant 0 : i32
    %c0_i32_0 = arith.constant 0 : i32
    %c0_i32_1 = arith.constant 0 : i32
    return %c0_i32, %c0_i32_0 : i32, i32
  }
  func.func @transform_18(%arg0: i32, %arg1: i32) -> (i32, i32) {
    %c0_i32 = arith.constant 0 : i32
    %c0_i32_0 = arith.constant 0 : i32
    return %arg0, %c0_i32 : i32, i32
  }
}

</mosaic_0001>

<llo_original>
// kernel: rwkv_forward.1
$region0: #{rwkv_forward.1}
  #allocation0 [shape = 'u32[]', space=smem, size = 0x4, offset = 0x4, fixed_abs, tag = 'smem constant byte address 0x4 - core index']
  #allocation1 [shape = 'u32[144,128]{1,0:T(1,128)}', space=vmem, size = 0x12000, scoped, tag = 'internal scratch']
  #allocation2 [shape = 'f32[8,32]{1,0:T(8,128)}', space=vmem, size = 0x1000, scoped, tag = 'scratch operand']
  #allocation3 [shape = 'f32[8,32]{1,0:T(8,128)}', space=vmem, size = 0x1000, scoped, tag = 'scratch operand']
  #allocation4 [shape = 'f32[8,32]{1,0:T(8,128)}', space=vmem, size = 0x1000, scoped, tag = 'scratch operand']
  #allocation5 [shape = 'f32[8,32]{1,0:T(8,128)}', space=vmem, size = 0x1000, scoped, tag = 'scratch operand']
  %s0 = inlined_call_operand.vmem [shape: f32[16,32], index: 0, kind: input, shape index: {}]
  %s1 = inlined_call_operand.vmem [shape: f32[1,32], index: 1, kind: input, shape index: {}]
  %s2 = inlined_call_operand.vmem [shape: f32[1,32], index: 2, kind: input, shape index: {}]
  %s3 = inlined_call_operand.vmem [shape: f32[2,1,32], index: 3, kind: input, shape index: {}]
  %s4 = inlined_call_operand.vmem [shape: f32[2,1,32], index: 4, kind: input, shape index: {}]
  %s5 = inlined_call_operand.vmem [shape: f32[2,1,32], index: 5, kind: input, shape index: {}]
  %s6 = inlined_call_operand.vmem [shape: f32[2,1,32], index: 6, kind: input, shape index: {}]
  %s7 = inlined_call_operand.vmem [shape: bf16[2,32,96], index: 7, kind: input, shape index: {}]
  %s8 = inlined_call_operand.vmem [shape: bf16[2,32,96], index: 8, kind: input, shape index: {}]
  %s9 = inlined_call_operand.vmem [shape: bf16[2,32,32], index: 9, kind: input, shape index: {}]
  %s10 = inlined_call_operand.vmem [shape: f32[2,1,32], index: 10, kind: input, shape index: {}]
  %s11 = inlined_call_operand.vmem [shape: f32[2,1,32], index: 11, kind: input, shape index: {}]
  %s12 = inlined_call_operand.vmem [shape: bf16[2,32,160], index: 12, kind: input, shape index: {}]
  %s13 = inlined_call_operand.vmem [shape: bf16[2,32,160], index: 13, kind: input, shape index: {}]
  %s14 = inlined_call_operand.vmem [shape: bf16[2,128,32], index: 14, kind: input, shape index: {}]
  %s15 = inlined_call_operand.vmem [shape: f32[1,32], index: 15, kind: input, shape index: {}]
  %s16 = inlined_call_operand.vmem [shape: f32[1,32], index: 16, kind: input, shape index: {}]
  %s17 = inlined_call_operand.vmem [shape: bf16[32,128], index: 17, kind: input, shape index: {}]
  %s18 = inlined_call_operand.hbm [shape: f32[16,128], index: 18, kind: output, shape index: {}]
  %s19 = sld [smem:[#allocation0]]
  $region113: #{rwkv_forward.1} parent=0
    _
  %s21 = ssub.s32 1, %s19
  %s22 = scalar_select 0, %s21, %s19
  $region1: #{rwkv_forward.1} parent=0
    #allocation6 [shape = 'u8[8192]{0}', space=vmem, size = 0x2000, scoped, tag = 'output window, operand 0']
    #allocation7 [shape = 's32[2]{0}', space=sflag, size = 0x8, scoped, tag = 'scoped memory for rwkv_forward.1']
    %23 = vsyncpa [#allocation7], 0
    %s24 = scalar_lea.sflag [#allocation7], 1
    %25 = vsyncpa %s24, 0
    loop: start=0, step=1, limit=6
    $region2: #{rwkv_forward.1} parent=1 // loop_pre_header
      _
    $region3: #{rwkv_forward.1} parent=1 // loop_header
      %s27 = sphi 0, %s31
      %p28 = scmp.ge.s32.totalorder %s27, 6
      %s34 = sphi 0, %s46
      %s35 = sphi 0, %s42
      %s36 = sphi 0, %s34
      %s37 = sphi 0, %s35
      %s38 = sphi 0, %s36
      %s39 = sphi 0, %s37
      %s49 = sphi 0, %s51
      %s52 = sphi 0, %s49
      %s53 = sphi 0, %s52
      %s69 = sphi 0, %s53
      %s73 = sphi 0, %s73
      %s75 = sphi 0, %s73
      %s76 = sphi 0, %s75
      %s90 = sphi 0, %s76
      %s94 = sphi 0, %s94
      %s96 = sphi 0, %s94
      %s97 = sphi 0, %s96
      %s111 = sphi 0, %s97
      %s117 = sphi 0, %s119
      %s120 = sphi 0, %s117
      %s121 = sphi 0, %s120
      %s137 = sphi 0, %s121
      %s143 = sphi 0, %s145
      %s146 = sphi 0, %s143
      %s147 = sphi 0, %s146
      %s163 = sphi 0, %s147
      %s169 = sphi 0, %s171
      %s172 = sphi 0, %s169
      %s173 = sphi 0, %s172
      %s189 = sphi 0, %s173
      %s195 = sphi 0, %s197
      %s198 = sphi 0, %s195
      %s199 = sphi 0, %s198
      %s215 = sphi 0, %s199
      %s221 = sphi 0, %s223
      %s224 = sphi 0, %s221
      %s225 = sphi 0, %s224
      %s241 = sphi 0, %s225
      %s247 = sphi 0, %s249
      %s250 = sphi 0, %s247
      %s251 = sphi 0, %s250
      %s267 = sphi 0, %s251
      %s273 = sphi 0, %s275
      %s276 = sphi 0, %s273
      %s277 = sphi 0, %s276
      %s293 = sphi 0, %s277
      %s299 = sphi 0, %s301
      %s302 = sphi 0, %s299
      %s303 = sphi 0, %s302
      %s319 = sphi 0, %s303
      %s325 = sphi 0, %s327
      %s328 = sphi 0, %s325
      %s329 = sphi 0, %s328
      %s345 = sphi 0, %s329
      %s351 = sphi 0, %s353
      %s354 = sphi 0, %s351
      %s355 = sphi 0, %s354
      %s371 = sphi 0, %s355
      %s377 = sphi 0, %s379
      %s380 = sphi 0, %s377
      %s381 = sphi 0, %s380
      %s397 = sphi 0, %s381
      %s403 = sphi 0, %s405
      %s406 = sphi 0, %s403
      %s407 = sphi 0, %s406
      %s423 = sphi 0, %s407
      %s427 = sphi 0, %s427
      %s429 = sphi 0, %s427
      %s430 = sphi 0, %s429
      %s444 = sphi 0, %s430
      %s448 = sphi 0, %s448
      %s450 = sphi 0, %s448
      %s451 = sphi 0, %s450
      %s465 = sphi 0, %s451
      %s469 = sphi 0, %s469
      %s471 = sphi 0, %s469
      %s472 = sphi 0, %s471
      %s486 = sphi 0, %s472
      %s492 = sphi 0, %s494
      %s495 = sphi 0, %s492
      %s496 = sphi 0, %s495
      %s512 = sphi 0, %s496
    $region4: #{rwkv_forward.1} parent=1 // loop_header_branch
      %30 = sbr.rel (%p28) target = $region8
    $region5: #{rwkv_forward.1} parent=1 // loop_body
      %s32 = ssub.s32 %s27, 1
      %s33 = ssub.s32 %s27, 2
      %s40 = sadd.s32 1, %s35
      %p41 = scmp.ge.s32.totalorder %s40, 2
      %s42 = scalar_select %p41, 0, %s40
      %s43 = sadd.s32 1, %s34
      %s44 = scalar_select %p41, %s43, %s34
      %p45 = scmp.ge.s32.totalorder %s44, 2
      %s46 = scalar_select %p45, 0, %s44
      %s47 = ssub.s32 %s34, %s46
      %p48 = scmp.eq.s32.totalorder %s47, 0
      %s50 = sadd.s32 %s49, 1
      %s51 = scalar_select %p48, %s49, %s50
      %p54 = pneg %p48
      %p55 = scmp.eq.s32.totalorder %s27, 3
      %p56 = por %p54, %p55
      %p57 = scmp.ne.s32.totalorder %s49, %s52
      %p58 = scmp.eq.s32.totalorder %s27, 0
      %p59 = por %p57, %p58
      %p60 = scmp.ne.s32.totalorder %s49, %s52
      %p61 = scmp.eq.s32.totalorder %s32, 3
      %p62 = por %p60, %p61
      %p63 = scmp.ne.s32.totalorder %s52, %s53
      %p64 = scmp.eq.s32.totalorder %s32, 0
      %p65 = por %p63, %p64
      %p66 = scmp.ne.s32.totalorder %s52, %s53
      %p67 = scmp.eq.s32.totalorder %s33, 3
      %p68 = por %p66, %p67
      %p70 = scmp.ne.s32.totalorder %s53, %s69
      %p71 = scmp.eq.s32.totalorder %s33, 0
      %p72 = por %p70, %p71
      %s74 = sadd.s32 %s73, 1
      %p77 = scmp.eq.s32.totalorder %s27, 3
      %p78 = scmp.ne.s32.totalorder %s73, %s75
      %p79 = scmp.eq.s32.totalorder %s27, 0
      %p80 = por %p78, %p79
      %p81 = scmp.ne.s32.totalorder %s73, %s75
      %p82 = scmp.eq.s32.totalorder %s32, 3
      %p83 = por %p81, %p82
      %p84 = scmp.ne.s32.totalorder %s75, %s76
      %p85 = scmp.eq.s32.totalorder %s32, 0
      %p86 = por %p84, %p85
      %p87 = scmp.ne.s32.totalorder %s75, %s76
      %p88 = scmp.eq.s32.totalorder %s33, 3
      %p89 = por %p87, %p88
      %p91 = scmp.ne.s32.totalorder %s76, %s90
      %p92 = scmp.eq.s32.totalorder %s33, 0
      %p93 = por %p91, %p92
      %s95 = sadd.s32 %s94, 1
      %p98 = scmp.eq.s32.totalorder %s27, 3
      %p99 = scmp.ne.s32.totalorder %s94, %s96
      %p100 = scmp.eq.s32.totalorder %s27, 0
      %p101 = por %p99, %p100
      %p102 = scmp.ne.s32.totalorder %s94, %s96
      %p103 = scmp.eq.s32.totalorder %s32, 3
      %p104 = por %p102, %p103
      %p105 = scmp.ne.s32.totalorder %s96, %s97
      %p106 = scmp.eq.s32.totalorder %s32, 0
      %p107 = por %p105, %p106
      %p108 = scmp.ne.s32.totalorder %s96, %s97
      %p109 = scmp.eq.s32.totalorder %s33, 3
      %p110 = por %p108, %p109
      %p112 = scmp.ne.s32.totalorder %s97, %s111
      %p113 = scmp.eq.s32.totalorder %s33, 0
      %p114 = por %p112, %p113
      %s115 = ssub.s32 %s35, %s42
      %p116 = scmp.eq.s32.totalorder %s115, 0
      %s118 = sadd.s32 %s117, 1
      %s119 = scalar_select %p116, %s117, %s118
      %p122 = pneg %p116
      %p123 = scmp.eq.s32.totalorder %s27, 3
      %p124 = por %p122, %p123
      %p125 = scmp.ne.s32.totalorder %s117, %s120
      %p126 = scmp.eq.s32.totalorder %s27, 0
      %p127 = por %p125, %p126
      %p128 = scmp.ne.s32.totalorder %s117, %s120
      %p129 = scmp.eq.s32.totalorder %s32, 3
      %p130 = por %p128, %p129
      %p131 = scmp.ne.s32.totalorder %s120, %s121
      %p132 = scmp.eq.s32.totalorder %s32, 0
      %p133 = por %p131, %p132
      %p134 = scmp.ne.s32.totalorder %s120, %s121
      %p135 = scmp.eq.s32.totalorder %s33, 3
      %p136 = por %p134, %p135
      %p138 = scmp.ne.s32.totalorder %s121, %s137
      %p139 = scmp.eq.s32.totalorder %s33, 0
      %p140 = por %p138, %p139
      %s141 = ssub.s32 %s35, %s42
      %p142 = scmp.eq.s32.totalorder %s141, 0
      %s144 = sadd.s32 %s143, 1
      %s145 = scalar_select %p142, %s143, %s144
      %p148 = pneg %p142
      %p149 = scmp.eq.s32.totalorder %s27, 3
      %p150 = por %p148, %p149
      %p151 = scmp.ne.s32.totalorder %s143, %s146
      %p152 = scmp.eq.s32.totalorder %s27, 0
      %p153 = por %p151, %p152
      %p154 = scmp.ne.s32.totalorder %s143, %s146
      %p155 = scmp.eq.s32.totalorder %s32, 3
      %p156 = por %p154, %p155
      %p157 = scmp.ne.s32.totalorder %s146, %s147
      %p158 = scmp.eq.s32.totalorder %s32, 0
      %p159 = por %p157, %p158
      %p160 = scmp.ne.s32.totalorder %s146, %s147
      %p161 = scmp.eq.s32.totalorder %s33, 3
      %p162 = por %p160, %p161
      %p164 = scmp.ne.s32.totalorder %s147, %s163
      %p165 = scmp.eq.s32.totalorder %s33, 0
      %p166 = por %p164, %p165
      %s167 = ssub.s32 %s35, %s42
      %p168 = scmp.eq.s32.totalorder %s167, 0
      %s170 = sadd.s32 %s169, 1
      %s171 = scalar_select %p168, %s169, %s170
      %p174 = pneg %p168
      %p175 = scmp.eq.s32.totalorder %s27, 3
      %p176 = por %p174, %p175
      %p177 = scmp.ne.s32.totalorder %s169, %s172
      %p178 = scmp.eq.s32.totalorder %s27, 0
      %p179 = por %p177, %p178
      %p180 = scmp.ne.s32.totalorder %s169, %s172
      %p181 = scmp.eq.s32.totalorder %s32, 3
      %p182 = por %p180, %p181
      %p183 = scmp.ne.s32.totalorder %s172, %s173
      %p184 = scmp.eq.s32.totalorder %s32, 0
      %p185 = por %p183, %p184
      %p186 = scmp.ne.s32.totalorder %s172, %s173
      %p187 = scmp.eq.s32.totalorder %s33, 3
      %p188 = por %p186, %p187
      %p190 = scmp.ne.s32.totalorder %s173, %s189
      %p191 = scmp.eq.s32.totalorder %s33, 0
      %p192 = por %p190, %p191
      %s193 = ssub.s32 %s35, %s42
      %p194 = scmp.eq.s32.totalorder %s193, 0
      %s196 = sadd.s32 %s195, 1
      %s197 = scalar_select %p194, %s195, %s196
      %p200 = pneg %p194
      %p201 = scmp.eq.s32.totalorder %s27, 3
      %p202 = por %p200, %p201
      %p203 = scmp.ne.s32.totalorder %s195, %s198
      %p204 = scmp.eq.s32.totalorder %s27, 0
      %p205 = por %p203, %p204
      %p206 = scmp.ne.s32.totalorder %s195, %s198
      %p207 = scmp.eq.s32.totalorder %s32, 3
      %p208 = por %p206, %p207
      %p209 = scmp.ne.s32.totalorder %s198, %s199
      %p210 = scmp.eq.s32.totalorder %s32, 0
      %p211 = por %p209, %p210
      %p212 = scmp.ne.s32.totalorder %s198, %s199
      %p213 = scmp.eq.s32.totalorder %s33, 3
      %p214 = por %p212, %p213
      %p216 = scmp.ne.s32.totalorder %s199, %s215
      %p217 = scmp.eq.s32.totalorder %s33, 0
      %p218 = por %p216, %p217
      %s219 = ssub.s32 %s35, %s42
      %p220 = scmp.eq.s32.totalorder %s219, 0
      %s222 = sadd.s32 %s221, 1
      %s223 = scalar_select %p220, %s221, %s222
      %p226 = pneg %p220
      %p227 = scmp.eq.s32.totalorder %s27, 3
      %p228 = por %p226, %p227
      %p229 = scmp.ne.s32.totalorder %s221, %s224
      %p230 = scmp.eq.s32.totalorder %s27, 0
      %p231 = por %p229, %p230
      %p232 = scmp.ne.s32.totalorder %s221, %s224
      %p233 = scmp.eq.s32.totalorder %s32, 3
      %p234 = por %p232, %p233
      %p235 = scmp.ne.s32.totalorder %s224, %s225
      %p236 = scmp.eq.s32.totalorder %s32, 0
      %p237 = por %p235, %p236
      %p238 = scmp.ne.s32.totalorder %s224, %s225
      %p239 = scmp.eq.s32.totalorder %s33, 3
      %p240 = por %p238, %p239
      %p242 = scmp.ne.s32.totalorder %s225, %s241
      %p243 = scmp.eq.s32.totalorder %s33, 0
      %p244 = por %p242, %p243
      %s245 = ssub.s32 %s35, %s42
      %p246 = scmp.eq.s32.totalorder %s245, 0
      %s248 = sadd.s32 %s247, 1
      %s249 = scalar_select %p246, %s247, %s248
      %p252 = pneg %p246
      %p253 = scmp.eq.s32.totalorder %s27, 3
      %p254 = por %p252, %p253
      %p255 = scmp.ne.s32.totalorder %s247, %s250
      %p256 = scmp.eq.s32.totalorder %s27, 0
      %p257 = por %p255, %p256
      %p258 = scmp.ne.s32.totalorder %s247, %s250
      %p259 = scmp.eq.s32.totalorder %s32, 3
      %p260 = por %p258, %p259
      %p261 = scmp.ne.s32.totalorder %s250, %s251
      %p262 = scmp.eq.s32.totalorder %s32, 0
      %p263 = por %p261, %p262
      %p264 = scmp.ne.s32.totalorder %s250, %s251
      %p265 = scmp.eq.s32.totalorder %s33, 3
      %p266 = por %p264, %p265
      %p268 = scmp.ne.s32.totalorder %s251, %s267
      %p269 = scmp.eq.s32.totalorder %s33, 0
      %p270 = por %p268, %p269
      %s271 = ssub.s32 %s35, %s42
      %p272 = scmp.eq.s32.totalorder %s271, 0
      %s274 = sadd.s32 %s273, 1
      %s275 = scalar_select %p272, %s273, %s274
      %p278 = pneg %p272
      %p279 = scmp.eq.s32.totalorder %s27, 3
      %p280 = por %p278, %p279
      %p281 = scmp.ne.s32.totalorder %s273, %s276
      %p282 = scmp.eq.s32.totalorder %s27, 0
      %p283 = por %p281, %p282
      %p284 = scmp.ne.s32.totalorder %s273, %s276
      %p285 = scmp.eq.s32.totalorder %s32, 3
      %p286 = por %p284, %p285
      %p287 = scmp.ne.s32.totalorder %s276, %s277
      %p288 = scmp.eq.s32.totalorder %s32, 0
      %p289 = por %p287, %p288
      %p290 = scmp.ne.s32.totalorder %s276, %s277
      %p291 = scmp.eq.s32.totalorder %s33, 3
      %p292 = por %p290, %p291
      %p294 = scmp.ne.s32.totalorder %s277, %s293
      %p295 = scmp.eq.s32.totalorder %s33, 0
      %p296 = por %p294, %p295
      %s297 = ssub.s32 %s35, %s42
      %p298 = scmp.eq.s32.totalorder %s297, 0
      %s300 = sadd.s32 %s299, 1
      %s301 = scalar_select %p298, %s299, %s300
      %p304 = pneg %p298
      %p305 = scmp.eq.s32.totalorder %s27, 3
      %p306 = por %p304, %p305
      %p307 = scmp.ne.s32.totalorder %s299, %s302
      %p308 = scmp.eq.s32.totalorder %s27, 0
      %p309 = por %p307, %p308
      %p310 = scmp.ne.s32.totalorder %s299, %s302
      %p311 = scmp.eq.s32.totalorder %s32, 3
      %p312 = por %p310, %p311
      %p313 = scmp.ne.s32.totalorder %s302, %s303
      %p314 = scmp.eq.s32.totalorder %s32, 0
      %p315 = por %p313, %p314
      %p316 = scmp.ne.s32.totalorder %s302, %s303
      %p317 = scmp.eq.s32.totalorder %s33, 3
      %p318 = por %p316, %p317
      %p320 = scmp.ne.s32.totalorder %s303, %s319
      %p321 = scmp.eq.s32.totalorder %s33, 0
      %p322 = por %p320, %p321
      %s323 = ssub.s32 %s35, %s42
      %p324 = scmp.eq.s32.totalorder %s323, 0
      %s326 = sadd.s32 %s325, 1
      %s327 = scalar_select %p324, %s325, %s326
      %p330 = pneg %p324
      %p331 = scmp.eq.s32.totalorder %s27, 3
      %p332 = por %p330, %p331
      %p333 = scmp.ne.s32.totalorder %s325, %s328
      %p334 = scmp.eq.s32.totalorder %s27, 0
      %p335 = por %p333, %p334
      %p336 = scmp.ne.s32.totalorder %s325, %s328
      %p337 = scmp.eq.s32.totalorder %s32, 3
      %p338 = por %p336, %p337
      %p339 = scmp.ne.s32.totalorder %s328, %s329
      %p340 = scmp.eq.s32.totalorder %s32, 0
      %p341 = por %p339, %p340
      %p342 = scmp.ne.s32.totalorder %s328, %s329
      %p343 = scmp.eq.s32.totalorder %s33, 3
      %p344 = por %p342, %p343
      %p346 = scmp.ne.s32.totalorder %s329, %s345
      %p347 = scmp.eq.s32.totalorder %s33, 0
      %p348 = por %p346, %p347
      %s349 = ssub.s32 %s35, %s42
      %p350 = scmp.eq.s32.totalorder %s349, 0
      %s352 = sadd.s32 %s351, 1
      %s353 = scalar_select %p350, %s351, %s352
      %p356 = pneg %p350
      %p357 = scmp.eq.s32.totalorder %s27, 3
      %p358 = por %p356, %p357
      %p359 = scmp.ne.s32.totalorder %s351, %s354
      %p360 = scmp.eq.s32.totalorder %s27, 0
      %p361 = por %p359, %p360
      %p362 = scmp.ne.s32.totalorder %s351, %s354
      %p363 = scmp.eq.s32.totalorder %s32, 3
      %p364 = por %p362, %p363
      %p365 = scmp.ne.s32.totalorder %s354, %s355
      %p366 = scmp.eq.s32.totalorder %s32, 0
      %p367 = por %p365, %p366
      %p368 = scmp.ne.s32.totalorder %s354, %s355
      %p369 = scmp.eq.s32.totalorder %s33, 3
      %p370 = por %p368, %p369
      %p372 = scmp.ne.s32.totalorder %s355, %s371
      %p373 = scmp.eq.s32.totalorder %s33, 0
      %p374 = por %p372, %p373
      %s375 = ssub.s32 %s35, %s42
      %p376 = scmp.eq.s32.totalorder %s375, 0
      %s378 = sadd.s32 %s377, 1
      %s379 = scalar_select %p376, %s377, %s378
      %p382 = pneg %p376
      %p383 = scmp.eq.s32.totalorder %s27, 3
      %p384 = por %p382, %p383
      %p385 = scmp.ne.s32.totalorder %s377, %s380
      %p386 = scmp.eq.s32.totalorder %s27, 0
      %p387 = por %p385, %p386
      %p388 = scmp.ne.s32.totalorder %s377, %s380
      %p389 = scmp.eq.s32.totalorder %s32, 3
      %p390 = por %p388, %p389
      %p391 = scmp.ne.s32.totalorder %s380, %s381
      %p392 = scmp.eq.s32.totalorder %s32, 0
      %p393 = por %p391, %p392
      %p394 = scmp.ne.s32.totalorder %s380, %s381
      %p395 = scmp.eq.s32.totalorder %s33, 3
      %p396 = por %p394, %p395
      %p398 = scmp.ne.s32.totalorder %s381, %s397
      %p399 = scmp.eq.s32.totalorder %s33, 0
      %p400 = por %p398, %p399
      %s401 = ssub.s32 %s35, %s42
      %p402 = scmp.eq.s32.totalorder %s401, 0
      %s404 = sadd.s32 %s403, 1
      %s405 = scalar_select %p402, %s403, %s404
      %p408 = pneg %p402
      %p409 = scmp.eq.s32.totalorder %s27, 3
      %p410 = por %p408, %p409
      %p411 = scmp.ne.s32.totalorder %s403, %s406
      %p412 = scmp.eq.s32.totalorder %s27, 0
      %p413 = por %p411, %p412
      %p414 = scmp.ne.s32.totalorder %s403, %s406
      %p415 = scmp.eq.s32.totalorder %s32, 3
      %p416 = por %p414, %p415
      %p417 = scmp.ne.s32.totalorder %s406, %s407
      %p418 = scmp.eq.s32.totalorder %s32, 0
      %p419 = por %p417, %p418
      %p420 = scmp.ne.s32.totalorder %s406, %s407
      %p421 = scmp.eq.s32.totalorder %s33, 3
      %p422 = por %p420, %p421
      %p424 = scmp.ne.s32.totalorder %s407, %s423
      %p425 = scmp.eq.s32.totalorder %s33, 0
      %p426 = por %p424, %p425
      %s428 = sadd.s32 %s427, 1
      %p431 = scmp.eq.s32.totalorder %s27, 3
      %p432 = scmp.ne.s32.totalorder %s427, %s429
      %p433 = scmp.eq.s32.totalorder %s27, 0
      %p434 = por %p432, %p433
      %p435 = scmp.ne.s32.totalorder %s427, %s429
      %p436 = scmp.eq.s32.totalorder %s32, 3
      %p437 = por %p435, %p436
      %p438 = scmp.ne.s32.totalorder %s429, %s430
      %p439 = scmp.eq.s32.totalorder %s32, 0
      %p440 = por %p438, %p439
      %p441 = scmp.ne.s32.totalorder %s429, %s430
      %p442 = scmp.eq.s32.totalorder %s33, 3
      %p443 = por %p441, %p442
      %p445 = scmp.ne.s32.totalorder %s430, %s444
      %p446 = scmp.eq.s32.totalorder %s33, 0
      %p447 = por %p445, %p446
      %s449 = sadd.s32 %s448, 1
      %p452 = scmp.eq.s32.totalorder %s27, 3
      %p453 = scmp.ne.s32.totalorder %s448, %s450
      %p454 = scmp.eq.s32.totalorder %s27, 0
      %p455 = por %p453, %p454
      %p456 = scmp.ne.s32.totalorder %s448, %s450
      %p457 = scmp.eq.s32.totalorder %s32, 3
      %p458 = por %p456, %p457
      %p459 = scmp.ne.s32.totalorder %s450, %s451
      %p460 = scmp.eq.s32.totalorder %s32, 0
      %p461 = por %p459, %p460
      %p462 = scmp.ne.s32.totalorder %s450, %s451
      %p463 = scmp.eq.s32.totalorder %s33, 3
      %p464 = por %p462, %p463
      %p466 = scmp.ne.s32.totalorder %s451, %s465
      %p467 = scmp.eq.s32.totalorder %s33, 0
      %p468 = por %p466, %p467
      %s470 = sadd.s32 %s469, 1
      %p473 = scmp.eq.s32.totalorder %s27, 3
      %p474 = scmp.ne.s32.totalorder %s469, %s471
      %p475 = scmp.eq.s32.totalorder %s27, 0
      %p476 = por %p474, %p475
      %p477 = scmp.ne.s32.totalorder %s469, %s471
      %p478 = scmp.eq.s32.totalorder %s32, 3
      %p479 = por %p477, %p478
      %p480 = scmp.ne.s32.totalorder %s471, %s472
      %p481 = scmp.eq.s32.totalorder %s32, 0
      %p482 = por %p480, %p481
      %p483 = scmp.ne.s32.totalorder %s471, %s472
      %p484 = scmp.eq.s32.totalorder %s33, 3
      %p485 = por %p483, %p484
      %p487 = scmp.ne.s32.totalorder %s472, %s486
      %p488 = scmp.eq.s32.totalorder %s33, 0
      %p489 = por %p487, %p488
      %s490 = ssub.s32 %s34, %s46
      %p491 = scmp.eq.s32.totalorder %s490, 0
      %s493 = sadd.s32 %s492, 1
      %s494 = scalar_select %p491, %s492, %s493
      %p497 = pneg %p491
      %p498 = scmp.eq.s32.totalorder %s27, 3
      %p499 = por %p497, %p498
      %p500 = scmp.ne.s32.totalorder %s492, %s495
      %p501 = scmp.eq.s32.totalorder %s27, 0
      %p502 = por %p500, %p501
      %p503 = scmp.ne.s32.totalorder %s492, %s495
      %p504 = scmp.eq.s32.totalorder %s32, 3
      %p505 = por %p503, %p504
      %p506 = scmp.ne.s32.totalorder %s495, %s496
      %p507 = scmp.eq.s32.totalorder %s32, 0
      %p508 = por %p506, %p507
      %p509 = scmp.ne.s32.totalorder %s495, %s496
      %p510 = scmp.eq.s32.totalorder %s33, 3
      %p511 = por %p509, %p510
      %p513 = scmp.ne.s32.totalorder %s496, %s512
      %p514 = scmp.eq.s32.totalorder %s33, 0
      %p515 = por %p513, %p514
      %p516 = scmp.le.s32.totalorder 1, %s27
      %p517 = scmp.lt.s32.totalorder %s27, 5
      %p518 = pnand %p516, %p517
      %p519 = pneg %p518
      // Predicated region
      $region9: #{rwkv_forward.1} parent=5 // pred_check
        _
      $region10: #{rwkv_forward.1} parent=5 // pred_check_branch
        %521 = sbr.rel (%p518) target = $region12
      $region11: #{rwkv_forward.1} parent=5 // pred_region
        %s522 = ssub.s32 %s27, 1
        // Predicated region
        $region13: #{rwkv_forward.1} parent=11 // pred_check
          %p523 = pneg %p86
        $region14: #{rwkv_forward.1} parent=11 // pred_check_branch
          %525 = sbr.rel (%p523) target = $region16
        $region15: #{rwkv_forward.1} parent=11 // pred_region
          _
        $region16: #{rwkv_forward.1} parent=11 // pred_fallthru
          _
        // Predicated region
        $region17: #{rwkv_forward.1} parent=11 // pred_check
          %p526 = pneg %p107
        $region18: #{rwkv_forward.1} parent=11 // pred_check_branch
          %528 = sbr.rel (%p526) target = $region20
        $region19: #{rwkv_forward.1} parent=11 // pred_region
          _
        $region20: #{rwkv_forward.1} parent=11 // pred_fallthru
          _
        // Predicated region
        $region21: #{rwkv_forward.1} parent=11 // pred_check
          %p529 = pneg %p440
        $region22: #{rwkv_forward.1} parent=11 // pred_check_branch
          %531 = sbr.rel (%p529) target = $region24
        $region23: #{rwkv_forward.1} parent=11 // pred_region
          _
        $region24: #{rwkv_forward.1} parent=11 // pred_fallthru
          _
        // Predicated region
        $region25: #{rwkv_forward.1} parent=11 // pred_check
          %p532 = pneg %p461
        $region26: #{rwkv_forward.1} parent=11 // pred_check_branch
          %534 = sbr.rel (%p532) target = $region28
        $region27: #{rwkv_forward.1} parent=11 // pred_region
          _
        $region28: #{rwkv_forward.1} parent=11 // pred_fallthru
          _
        // Predicated region
        $region29: #{rwkv_forward.1} parent=11 // pred_check
          %p535 = pneg %p482
        $region30: #{rwkv_forward.1} parent=11 // pred_check_branch
          %537 = sbr.rel (%p535) target = $region32
        $region31: #{rwkv_forward.1} parent=11 // pred_region
          _
        $region32: #{rwkv_forward.1} parent=11 // pred_fallthru
          _
      $region12: #{rwkv_forward.1} parent=5 // pred_fallthru
        _
      %p538 = scmp.lt.s32.totalorder %s27, 4
      // Predicated region
      $region33: #{rwkv_forward.1} parent=5 // pred_check
        %p539 = pneg %p538
      $region34: #{rwkv_forward.1} parent=5 // pred_check_branch
        %541 = sbr.rel (%p539) target = $region36
      $region35: #{rwkv_forward.1} parent=5 // pred_region
        // Predicated region
        $region37: #{rwkv_forward.1} parent=35 // pred_check
          %p542 = pneg %p59
        $region38: #{rwkv_forward.1} parent=35 // pred_check_branch
          %544 = sbr.rel (%p542) target = $region40
        $region39: #{rwkv_forward.1} parent=35 // pred_region
          %p545 = scmp.lt.s32.totalorder %s34, 1
          %s546 = scalar_select %p545, %s34, 1
          %s547 = smul.addr %s546, 8
          %s548 = scalar_lea.vmem %s0, %s547
        $region40: #{rwkv_forward.1} parent=35 // pred_fallthru
          _
        // Predicated region
        $region41: #{rwkv_forward.1} parent=35 // pred_check
          %p549 = pneg %p127
        $region42: #{rwkv_forward.1} parent=35 // pred_check_branch
          %551 = sbr.rel (%p549) target = $region44
        $region43: #{rwkv_forward.1} parent=35 // pred_region
          %p552 = scmp.lt.s32.totalorder %s35, 1
          %s553 = scalar_select %p552, %s35, 1
          %s554 = scalar_lea.vmem %s3, %s553
        $region44: #{rwkv_forward.1} parent=35 // pred_fallthru
          _
        // Predicated region
        $region45: #{rwkv_forward.1} parent=35 // pred_check
          %p555 = pneg %p153
        $region46: #{rwkv_forward.1} parent=35 // pred_check_branch
          %557 = sbr.rel (%p555) target = $region48
        $region47: #{rwkv_forward.1} parent=35 // pred_region
          %p558 = scmp.lt.s32.totalorder %s35, 1
          %s559 = scalar_select %p558, %s35, 1
          %s560 = scalar_lea.vmem %s4, %s559
        $region48: #{rwkv_forward.1} parent=35 // pred_fallthru
          _
        // Predicated region
        $region49: #{rwkv_forward.1} parent=35 // pred_check
          %p561 = pneg %p179
        $region50: #{rwkv_forward.1} parent=35 // pred_check_branch
          %563 = sbr.rel (%p561) target = $region52
        $region51: #{rwkv_forward.1} parent=35 // pred_region
          %p564 = scmp.lt.s32.totalorder %s35, 1
          %s565 = scalar_select %p564, %s35, 1
          %s566 = scalar_lea.vmem %s5, %s565
        $region52: #{rwkv_forward.1} parent=35 // pred_fallthru
          _
        // Predicated region
        $region53: #{rwkv_forward.1} parent=35 // pred_check
          %p567 = pneg %p205
        $region54: #{rwkv_forward.1} parent=35 // pred_check_branch
          %569 = sbr.rel (%p567) target = $region56
        $region55: #{rwkv_forward.1} parent=35 // pred_region
          %p570 = scmp.lt.s32.totalorder %s35, 1
          %s571 = scalar_select %p570, %s35, 1
          %s572 = scalar_lea.vmem %s6, %s571
        $region56: #{rwkv_forward.1} parent=35 // pred_fallthru
          _
        // Predicated region
        $region57: #{rwkv_forward.1} parent=35 // pred_check
          %p573 = pneg %p231
        $region58: #{rwkv_forward.1} parent=35 // pred_check_branch
          %575 = sbr.rel (%p573) target = $region60
        $region59: #{rwkv_forward.1} parent=35 // pred_region
          %p576 = scmp.lt.s32.totalorder %s35, 1
          %s577 = scalar_select %p576, %s35, 1
          %s578 = smul.addr %s577, 4
          %s579 = smul.addr %s578, 4
          %s580 = scalar_lea.vmem %s7, %s579
        $region60: #{rwkv_forward.1} parent=35 // pred_fallthru
          _
        // Predicated region
        $region61: #{rwkv_forward.1} parent=35 // pred_check
          %p581 = pneg %p257
        $region62: #{rwkv_forward.1} parent=35 // pred_check_branch
          %583 = sbr.rel (%p581) target = $region64
        $region63: #{rwkv_forward.1} parent=35 // pred_region
          %p584 = scmp.lt.s32.totalorder %s35, 1
          %s585 = scalar_select %p584, %s35, 1
          %s586 = smul.addr %s585, 4
          %s587 = smul.addr %s586, 4
          %s588 = scalar_lea.vmem %s8, %s587
        $region64: #{rwkv_forward.1} parent=35 // pred_fallthru
          _
        // Predicated region
        $region65: #{rwkv_forward.1} parent=35 // pred_check
          %p589 = pneg %p283
        $region66: #{rwkv_forward.1} parent=35 // pred_check_branch
          %591 = sbr.rel (%p589) target = $region68
        $region67: #{rwkv_forward.1} parent=35 // pred_region
          %p592 = scmp.lt.s32.totalorder %s35, 1
          %s593 = scalar_select %p592, %s35, 1
          %s594 = smul.addr %s593, 4
          %s595 = smul.addr %s594, 4
          %s596 = scalar_lea.vmem %s9, %s595
        $region68: #{rwkv_forward.1} parent=35 // pred_fallthru
          _
        // Predicated region
        $region69: #{rwkv_forward.1} parent=35 // pred_check
          %p597 = pneg %p309
        $region70: #{rwkv_forward.1} parent=35 // pred_check_branch
          %599 = sbr.rel (%p597) target = $region72
        $region71: #{rwkv_forward.1} parent=35 // pred_region
          %p600 = scmp.lt.s32.totalorder %s35, 1
          %s601 = scalar_select %p600, %s35, 1
          %s602 = scalar_lea.vmem %s10, %s601
        $region72: #{rwkv_forward.1} parent=35 // pred_fallthru
          _
        // Predicated region
        $region73: #{rwkv_forward.1} parent=35 // pred_check
          %p603 = pneg %p335
        $region74: #{rwkv_forward.1} parent=35 // pred_check_branch
          %605 = sbr.rel (%p603) target = $region76
        $region75: #{rwkv_forward.1} parent=35 // pred_region
          %p606 = scmp.lt.s32.totalorder %s35, 1
          %s607 = scalar_select %p606, %s35, 1
          %s608 = scalar_lea.vmem %s11, %s607
        $region76: #{rwkv_forward.1} parent=35 // pred_fallthru
          _
        // Predicated region
        $region77: #{rwkv_forward.1} parent=35 // pred_check
          %p609 = pneg %p361
        $region78: #{rwkv_forward.1} parent=35 // pred_check_branch
          %611 = sbr.rel (%p609) target = $region80
        $region79: #{rwkv_forward.1} parent=35 // pred_region
          %p612 = scmp.lt.s32.totalorder %s35, 1
          %s613 = scalar_select %p612, %s35, 1
          %s614 = smul.addr %s613, 8
          %s615 = smul.addr %s614, 4
          %s616 = scalar_lea.vmem %s12, %s615
        $region80: #{rwkv_forward.1} parent=35 // pred_fallthru
          _
        // Predicated region
        $region81: #{rwkv_forward.1} parent=35 // pred_check
          %p617 = pneg %p387
        $region82: #{rwkv_forward.1} parent=35 // pred_check_branch
          %619 = sbr.rel (%p617) target = $region84
        $region83: #{rwkv_forward.1} parent=35 // pred_region
          %p620 = scmp.lt.s32.totalorder %s35, 1
          %s621 = scalar_select %p620, %s35, 1
          %s622 = smul.addr %s621, 8
          %s623 = smul.addr %s622, 4
          %s624 = scalar_lea.vmem %s13, %s623
        $region84: #{rwkv_forward.1} parent=35 // pred_fallthru
          _
        // Predicated region
        $region85: #{rwkv_forward.1} parent=35 // pred_check
          %p625 = pneg %p413
        $region86: #{rwkv_forward.1} parent=35 // pred_check_branch
          %627 = sbr.rel (%p625) target = $region88
        $region87: #{rwkv_forward.1} parent=35 // pred_region
          %p628 = scmp.lt.s32.totalorder %s35, 1
          %s629 = scalar_select %p628, %s35, 1
          %s630 = smul.addr %s629, 16
          %s631 = smul.addr %s630, 4
          %s632 = scalar_lea.vmem %s14, %s631
        $region88: #{rwkv_forward.1} parent=35 // pred_fallthru
          _
      $region36: #{rwkv_forward.1} parent=5 // pred_fallthru
        _
      %p633 = scmp.le.s32.totalorder 1, %s27
      %p634 = scmp.lt.s32.totalorder %s27, 5
      %p635 = pnand %p633, %p634
      %p636 = pneg %p635
      // Predicated region
      $region89: #{rwkv_forward.1} parent=5 // pred_check
        _
      $region90: #{rwkv_forward.1} parent=5 // pred_check_branch
        %638 = sbr.rel (%p635) target = $region92
      $region91: #{rwkv_forward.1} parent=5 // pred_region
        %s639 = ssub.s32 %s27, 1
        %p640 = scmp.lt.s32.totalorder %s36, 1
        %s641 = scalar_select %p640, %s36, 1
        %s642 = smul.addr %s641, 8
        %s643 = scalar_lea.vmem %s0, %s642
        %p644 = pneg %p65
        %p645 = pneg %p62
        %p646 = pneg %p86
        %p647 = pneg %p83
        %p648 = pneg %p107
        %p649 = pneg %p104
        %p650 = scmp.lt.s32.totalorder %s37, 1
        %s651 = scalar_select %p650, %s37, 1
        %s652 = scalar_lea.vmem %s3, %s651
        %p653 = pneg %p133
        %p654 = pneg %p130
        %p655 = scmp.lt.s32.totalorder %s37, 1
        %s656 = scalar_select %p655, %s37, 1
        %s657 = scalar_lea.vmem %s4, %s656
        %p658 = pneg %p159
        %p659 = pneg %p156
        %p660 = scmp.lt.s32.totalorder %s37, 1
        %s661 = scalar_select %p660, %s37, 1
        %s662 = scalar_lea.vmem %s5, %s661
        %p663 = pneg %p185
        %p664 = pneg %p182
        %p665 = scmp.lt.s32.totalorder %s37, 1
        %s666 = scalar_select %p665, %s37, 1
        %s667 = scalar_lea.vmem %s6, %s666
        %p668 = pneg %p211
        %p669 = pneg %p208
        %p670 = scmp.lt.s32.totalorder %s37, 1
        %s671 = scalar_select %p670, %s37, 1
        %s672 = smul.addr %s671, 4
        %s673 = smul.addr %s672, 4
        %s674 = scalar_lea.vmem %s7, %s673
        %p675 = pneg %p237
        %p676 = pneg %p234
        %p677 = scmp.lt.s32.totalorder %s37, 1
        %s678 = scalar_select %p677, %s37, 1
        %s679 = smul.addr %s678, 4
        %s680 = smul.addr %s679, 4
        %s681 = scalar_lea.vmem %s8, %s680
        %p682 = pneg %p263
        %p683 = pneg %p260
        %p684 = scmp.lt.s32.totalorder %s37, 1
        %s685 = scalar_select %p684, %s37, 1
        %s686 = smul.addr %s685, 4
        %s687 = smul.addr %s686, 4
        %s688 = scalar_lea.vmem %s9, %s687
        %p689 = pneg %p289
        %p690 = pneg %p286
        %p691 = scmp.lt.s32.totalorder %s37, 1
        %s692 = scalar_select %p691, %s37, 1
        %s693 = scalar_lea.vmem %s10, %s692
        %p694 = pneg %p315
        %p695 = pneg %p312
        %p696 = scmp.lt.s32.totalorder %s37, 1
        %s697 = scalar_select %p696, %s37, 1
        %s698 = scalar_lea.vmem %s11, %s697
        %p699 = pneg %p341
        %p700 = pneg %p338
        %p701 = scmp.lt.s32.totalorder %s37, 1
        %s702 = scalar_select %p701, %s37, 1
        %s703 = smul.addr %s702, 8
        %s704 = smul.addr %s703, 4
        %s705 = scalar_lea.vmem %s12, %s704
        %p706 = pneg %p367
        %p707 = pneg %p364
        %p708 = scmp.lt.s32.totalorder %s37, 1
        %s709 = scalar_select %p708, %s37, 1
        %s710 = smul.addr %s709, 8
        %s711 = smul.addr %s710, 4
        %s712 = scalar_lea.vmem %s13, %s711
        %p713 = pneg %p393
        %p714 = pneg %p390
        %p715 = scmp.lt.s32.totalorder %s37, 1
        %s716 = scalar_select %p715, %s37, 1
        %s717 = smul.addr %s716, 16
        %s718 = smul.addr %s717, 4
        %s719 = scalar_lea.vmem %s14, %s718
        %p720 = pneg %p419
        %p721 = pneg %p416
        %p722 = pneg %p440
        %p723 = pneg %p437
        %p724 = pneg %p461
        %p725 = pneg %p458
        %p726 = pneg %p482
        %p727 = pneg %p479
        %p728 = pneg %p508
        %p729 = pneg %p505
        %s730 = sand.u32 %s495, 1
        %s731 = scalar_lea.sflag [#allocation7], %s730
        %s732 = sand.u32 %s495, 1
        %s733 = smul.addr %s732, 8
        %s734 = scalar_lea.vmem [#allocation6], %s733
        %p735 = scmp.lt.s32.totalorder %s36, 1
        %s736 = scalar_select %p735, %s36, 1
        %s737 = smul.addr %s736, 8
        %s738 = scalar_lea.vmem %s0, %s737
        %p739 = scmp.lt.s32.totalorder %s37, 1
        %s740 = scalar_select %p739, %s37, 1
        %s741 = scalar_lea.vmem %s3, %s740
        %p742 = scmp.lt.s32.totalorder %s37, 1
        %s743 = scalar_select %p742, %s37, 1
        %s744 = scalar_lea.vmem %s4, %s743
        %p745 = scmp.lt.s32.totalorder %s37, 1
        %s746 = scalar_select %p745, %s37, 1
        %s747 = scalar_lea.vmem %s5, %s746
        %p748 = scmp.lt.s32.totalorder %s37, 1
        %s749 = scalar_select %p748, %s37, 1
        %s750 = scalar_lea.vmem %s6, %s749
        %p751 = scmp.lt.s32.totalorder %s37, 1
        %s752 = scalar_select %p751, %s37, 1
        %s753 = smul.addr %s752, 4
        %s754 = smul.addr %s753, 4
        %s755 = scalar_lea.vmem %s7, %s754
        %p756 = scmp.lt.s32.totalorder %s37, 1
        %s757 = scalar_select %p756, %s37, 1
        %s758 = smul.addr %s757, 4
        %s759 = smul.addr %s758, 4
        %s760 = scalar_lea.vmem %s8, %s759
        %p761 = scmp.lt.s32.totalorder %s37, 1
        %s762 = scalar_select %p761, %s37, 1
        %s763 = smul.addr %s762, 4
        %s764 = smul.addr %s763, 4
        %s765 = scalar_lea.vmem %s9, %s764
        %p766 = scmp.lt.s32.totalorder %s37, 1
        %s767 = scalar_select %p766, %s37, 1
        %s768 = scalar_lea.vmem %s10, %s767
        %p769 = scmp.lt.s32.totalorder %s37, 1
        %s770 = scalar_select %p769, %s37, 1
        %s771 = scalar_lea.vmem %s11, %s770
        %p772 = scmp.lt.s32.totalorder %s37, 1
        %s773 = scalar_select %p772, %s37, 1
        %s774 = smul.addr %s773, 8
        %s775 = smul.addr %s774, 4
        %s776 = scalar_lea.vmem %s12, %s775
        %p777 = scmp.lt.s32.totalorder %s37, 1
        %s778 = scalar_select %p777, %s37, 1
        %s779 = smul.addr %s778, 8
        %s780 = smul.addr %s779, 4
        %s781 = scalar_lea.vmem %s13, %s780
        %p782 = scmp.lt.s32.totalorder %s37, 1
        %s783 = scalar_select %p782, %s37, 1
        %s784 = smul.addr %s783, 16
        %s785 = smul.addr %s784, 4
        %s786 = scalar_lea.vmem %s14, %s785
        %p788 = scmp.eq.s32.totalorder %s37, 0
        // Predicated region
        $region93: #{rwkv_forward.1} parent=91 // pred_check
          %p789 = pneg %p788
        $region94: #{rwkv_forward.1} parent=91 // pred_check_branch
          %791 = sbr.rel (%p789) target = $region96
        $region95: #{rwkv_forward.1} parent=91 // pred_region
          %v792 = vld [vmem:[%s738] sm:$0xff]
          %v793 = vld [vmem:[%s1] sm:$0x1]
          %v794 = vld [vmem:[%s2] sm:$0x1]
          %vm795 = vcmask 261120
          %v796 = vsel %vm795, %v792, 0.0
          %797 = vadd.xlane.f32.xlu0 %v796
          %v798 = vpop.xlane.xlu0 %797
          %v799 = vrcp.pop 32.0
          %v800 = vmul.f32 %v798, %v799
          %v801 = vsub.f32 %v792, %v800
          %v802 = vmul.f32 %v801, %v801
          %v803 = vsel %vm795, %v802, 0.0
          %804 = vadd.xlane.f32.xlu0 %v803
          %v805 = vpop.xlane.xlu0 %804
          %v806 = vmul.f32 %v805, %v799
          %v807 = vadd.f32 %v806, 1e-05
          %v808 = vrsqrt.pop %v807
          %v809 = vmul.f32 %v801, %v808
          %v811 = vlaneseq
          %v812 = vshrl.u32 %v811, 7
          %v813 = vsub.s32 0, %v812
          %v814 = vrot.slane %v793, %v813
          %v816 = vmul.f32 %v809, %v814
          %v818 = vlaneseq
          %v819 = vshrl.u32 %v818, 7
          %v820 = vsub.s32 0, %v819
          %v821 = vrot.slane %v794, %v820
          %v823 = vadd.f32 %v816, %v821
          %824 = vst.msk [vmem:[#allocation2] sm:$0xff] %vm795, %v823
        $region96: #{rwkv_forward.1} parent=91 // pred_fallthru
          _
        %v825 = vld [vmem:[#allocation2] sm:$0xff]
        %v826 = vlaneseq
        %v827 = vshrl.u32 %v826, 7
        %vm828 = vcmp.lt.s32.totalorder %v827, 1
        %v829 = vld [vmem:[%s741] sm:$0x1]
        %v830 = vld [vmem:[%s744] sm:$0x1]
        %vm831 = vcmask 261120
        %v832 = vsel %vm831, %v825, 0.0
        %833 = vadd.xlane.f32.xlu0 %v832
        %v834 = vpop.xlane.xlu0 %833
        %v835 = vrcp.pop 32.0
        %v836 = vmul.f32 %v834, %v835
        %v837 = vsub.f32 %v825, %v836
        %v838 = vmul.f32 %v837, %v837
        %v839 = vsel %vm831, %v838, 0.0
        %840 = vadd.xlane.f32.xlu0 %v839
        %v841 = vpop.xlane.xlu0 %840
        %v842 = vmul.f32 %v841, %v835
        %v843 = vadd.f32 %v842, 1e-05
        %v844 = vrsqrt.pop %v843
        %v845 = vmul.f32 %v837, %v844
        %v847 = vlaneseq
        %v848 = vshrl.u32 %v847, 7
        %v849 = vsub.s32 0, %v848
        %v850 = vrot.slane %v829, %v849
        %v852 = vmul.f32 %v845, %v850
        %v854 = vlaneseq
        %v855 = vshrl.u32 %v854, 7
        %v856 = vsub.s32 0, %v855
        %v857 = vrot.slane %v830, %v856
        %v859 = vadd.f32 %v852, %v857
        %v860 = vrot.slane %v859, 7
        %v861 = vsel %vm828, 0.0, %v860
        %v862 = vpack.c.bf16 %v859, %v859
        %v863 = vld [vmem:[%s755] sm:$0xf]
        %v864 = vld [vmem:[%s755 + $0x4] sm:$0xf]
        %v865 = vld [vmem:[%s755 + $0x8] sm:$0xf]
        %v866 = vld [vmem:[%s755 + $0xc] sm:$0xf]
        %v867 = vpack.c.bf16 %v861, %v861
        %v868 = vld [vmem:[%s760] sm:$0xf]
        %v869 = vld [vmem:[%s760 + $0x4] sm:$0xf]
        %v870 = vld [vmem:[%s760 + $0x8] sm:$0xf]
        %v871 = vld [vmem:[%s760 + $0xc] sm:$0xf]
        %v876 = vunpack.c.l.b16 %v868
        %v877 = vunpack.c.l.b16 %v869
        %v878 = vunpack.c.l.b16 %v870
        %v879 = vunpack.c.l.b16 %v871
        %v880 = vpack.c.b16 %v877, %v876
        %v881 = vpack.c.b16 %v879, %v878
        %v885 = vsel %vm831, %v867, 0
        %887 = vmatprep.subr.bf16.mxu0 0
        %888 = vmatpush1.bf16.msra.mxu0 %v880
        %889 = vmatprep.subr.bf16.mxu0 0
        %890 = vmatpush1.bf16.msra.mxu0 %v881
        %891 = vmatprep.subr.bf16.mxu0 0
        %892 = vmatpush1.bf16.msra.mxu0 0
        %893 = vmatprep.subr.bf16.mxu0 0
        %894 = vmatpush1.bf16.msra.mxu0 0
        %895 = vmatprep.subr.bf16.mxu0 0
        %896 = vmatpush1.bf16.msra.mxu0 0
        %897 = vmatprep.subr.bf16.mxu0 0
        %898 = vmatpush1.bf16.msra.mxu0 0
        %899 = vmatprep.subr.bf16.mxu0 0
        %900 = vmatpush1.bf16.msra.mxu0 0
        %901 = vmatprep.subr.bf16.mxu0 0
        %902 = vmatpush1.bf16.msra.mxu0 0
        %903 = vmatprep.subr.bf16.mxu0 0
        %904 = vmatpush1.bf16.msra.mxu0 0
        %905 = vmatprep.subr.bf16.mxu0 0
        %906 = vmatpush1.bf16.msra.mxu0 0
        %907 = vmatprep.subr.bf16.mxu0 0
        %908 = vmatpush1.bf16.msra.mxu0 0
        %909 = vmatprep.subr.bf16.mxu0 0
        %910 = vmatpush1.bf16.msra.mxu0 0
        %911 = vmatprep.subr.bf16.mxu0 0
        %912 = vmatpush1.bf16.msra.mxu0 0
        %913 = vmatprep.subr.bf16.mxu0 0
        %914 = vmatpush1.bf16.msra.mxu0 0
        %915 = vmatprep.subr.bf16.mxu0 0
        %916 = vmatpush1.bf16.msra.mxu0 0
        %917 = vmatprep.subr.bf16.mxu0 0
        %918 = vmatpush1.bf16.msra.mxu0 0
        %919 = vmatprep.mubr.bf16.mxu0 0
        %920 = vmatmul.mubr.bf16.gmra.mrb[0].mxu0 %v885
        %v921 = vpop.f32.mrb[0].mxu0
        %v922 = vadd.f32 0.0, %v921
        %v923 = vpop.f32.mrb[0].mxu0
        %v924 = vpop.f32.mrb[0].mxu0
        %v925 = vpop.f32.mrb[0].mxu0
        %926 = vdwg.mxu0
        %v931 = vunpack.c.l.b16 %v863
        %v932 = vunpack.c.l.b16 %v864
        %v933 = vunpack.c.l.b16 %v865
        %v934 = vunpack.c.l.b16 %v866
        %v935 = vpack.c.b16 %v932, %v931
        %v936 = vpack.c.b16 %v934, %v933
        %v940 = vsel %vm831, %v862, 0
        %942 = vmatprep.subr.bf16.mxu0 0
        %943 = vmatpush1.bf16.msra.mxu0 %v935
        %944 = vmatprep.subr.bf16.mxu0 0
        %945 = vmatpush1.bf16.msra.mxu0 %v936
        %946 = vmatprep.subr.bf16.mxu0 0
        %947 = vmatpush1.bf16.msra.mxu0 0
        %948 = vmatprep.subr.bf16.mxu0 0
        %949 = vmatpush1.bf16.msra.mxu0 0
        %950 = vmatprep.subr.bf16.mxu0 0
        %951 = vmatpush1.bf16.msra.mxu0 0
        %952 = vmatprep.subr.bf16.mxu0 0
        %953 = vmatpush1.bf16.msra.mxu0 0
        %954 = vmatprep.subr.bf16.mxu0 0
        %955 = vmatpush1.bf16.msra.mxu0 0
        %956 = vmatprep.subr.bf16.mxu0 0
        %957 = vmatpush1.bf16.msra.mxu0 0
        %958 = vmatprep.subr.bf16.mxu0 0
        %959 = vmatpush1.bf16.msra.mxu0 0
        %960 = vmatprep.subr.bf16.mxu0 0
        %961 = vmatpush1.bf16.msra.mxu0 0
        %962 = vmatprep.subr.bf16.mxu0 0
        %963 = vmatpush1.bf16.msra.mxu0 0
        %964 = vmatprep.subr.bf16.mxu0 0
        %965 = vmatpush1.bf16.msra.mxu0 0
        %966 = vmatprep.subr.bf16.mxu0 0
        %967 = vmatpush1.bf16.msra.mxu0 0
        %968 = vmatprep.subr.bf16.mxu0 0
        %969 = vmatpush1.bf16.msra.mxu0 0
        %970 = vmatprep.subr.bf16.mxu0 0
        %971 = vmatpush1.bf16.msra.mxu0 0
        %972 = vmatprep.subr.bf16.mxu0 0
        %973 = vmatpush1.bf16.msra.mxu0 0
        %974 = vmatprep.mubr.bf16.mxu0 0
        %975 = vmatmul.mubr.bf16.gmra.mrb[0].mxu0 %v940
        %v976 = vpop.f32.mrb[0].mxu0
        %v977 = vadd.f32 %v922, %v976
        %v978 = vpop.f32.mrb[0].mxu0
        %v979 = vpop.f32.mrb[0].mxu0
        %v980 = vpop.f32.mrb[0].mxu0
        %981 = vdwg.mxu0
        %982 = vst.msk [vmem:[#allocation3] sm:$0xff] %vm831, %v977
        %984 = vrot.lane.b32.xlu0 %v977, 96
        %v985 = vpop.permute.xlu0 %984
        %987 = vst.msk [vmem:[#allocation4] sm:$0xff] %vm831, %v985
        %v988 = vxor.u32 %v977, 2147483648
        %v989 = vmul.f32 %v988, 1.442695
        %v990 = vpow.pop %v989
        %v991 = vadd.f32 %v990, 1.0
        %v992 = vrcp.pop %v991
        %v993 = vmul.f32 1.0, %v992
        %v994 = vld [vmem:[%s747] sm:$0x1]
        %v995 = vld [vmem:[%s750] sm:$0x1]
        %v996 = vld [vmem:[#allocation3] sm:$0x1]
        %v997 = vld [vmem:[#allocation4] sm:$0x1]
        %v998 = vadd.f32 %v995, %v996
        %v999 = vsub.f32 -1e+38, %v998
        %v1000 = vand.u32 2147483647, %v999
        %v1001 = vsub.f32 0.0, %v1000
        %v1002 = vmul.f32 %v1001, 1.442695
        %v1003 = vpow.pop %v1002
        %vm1004 = vcmp.ge.f32.partialorder %v999, 0.0
        %v1005 = vsel %vm1004, 1.0, %v1003
        %v1006 = vsel %vm1004, %v1003, 1.0
        %v1007 = vmul.f32 %v1005, 0.0
        %v1008 = vmul.f32 %v1006, %v997
        %v1009 = vadd.f32 %v1007, %v1008
        %v1010 = vadd.f32 %v1007, %v1006
        %v1011 = vrcp.pop %v1010
        %v1012 = vmul.f32 %v1009, %v1011
        %vm1013 = vcmask 253952
        %1014 = vst.msk [vmem:[#allocation5] sm:$0x1] %vm1013, %v1012
        %v1015 = vadd.f32 %v994, -1e+38
        %v1016 = vsub.f32 %v1015, %v996
        %v1017 = vand.u32 2147483647, %v1016
        %v1018 = vsub.f32 0.0, %v1017
        %v1019 = vmul.f32 %v1018, 1.442695
        %v1020 = vpow.pop %v1019
        %vm1021 = vcmp.ge.f32.partialorder %v1016, 0.0
        %v1022 = vsel %vm1021, 1.0, %v1020
        %v1023 = vsel %vm1021, %v1020, 1.0
        %v1024 = vmul.f32 %v1022, 0.0
        %v1025 = vmul.f32 %v1023, %v997
        %v1026 = vadd.f32 %v1024, %v1025
        %v1027 = vadd.f32 %v1024, %v1023
        %v1028 = vmax.f32 %v1015, %v996
        %v1029 = vld [vmem:[#allocation3 + $0x1] sm:$0x1]
        %v1030 = vld [vmem:[#allocation4 + $0x1] sm:$0x1]
        %v1031 = vadd.f32 %v995, %v1029
        %v1032 = vsub.f32 %v1028, %v1031
        %v1033 = vand.u32 2147483647, %v1032
        %v1034 = vsub.f32 0.0, %v1033
        %v1035 = vmul.f32 %v1034, 1.442695
        %v1036 = vpow.pop %v1035
        %vm1037 = vcmp.ge.f32.partialorder %v1032, 0.0
        %v1038 = vsel %vm1037, 1.0, %v1036
        %v1039 = vsel %vm1037, %v1036, 1.0
        %v1040 = vmul.f32 %v1038, %v1026
        %v1041 = vmul.f32 %v1039, %v1030
        %v1042 = vadd.f32 %v1040, %v1041
        %v1043 = vmul.f32 %v1038, %v1027
        %v1044 = vadd.f32 %v1043, %v1039
        %v1045 = vrcp.pop %v1044
        %v1046 = vmul.f32 %v1042, %v1045
        %1047 = vst.msk [vmem:[#allocation5 + $0x1] sm:$0x1] %vm1013, %v1046
        %v1048 = vadd.f32 %v994, %v1028
        %v1049 = vsub.f32 %v1048, %v1029
        %v1050 = vand.u32 2147483647, %v1049
        %v1051 = vsub.f32 0.0, %v1050
        %v1052 = vmul.f32 %v1051, 1.442695
        %v1053 = vpow.pop %v1052
        %vm1054 = vcmp.ge.f32.partialorder %v1049, 0.0
        %v1055 = vsel %vm1054, 1.0, %v1053
        %v1056 = vsel %vm1054, %v1053, 1.0
        %v1057 = vmul.f32 %v1055, %v1026
        %v1058 = vmul.f32 %v1056, %v1030
        %v1059 = vadd.f32 %v1057, %v1058
        %v1060 = vmul.f32 %v1055, %v1027
        %v1061 = vadd.f32 %v1060, %v1056
        %v1062 = vmax.f32 %v1048, %v1029
        %v1063 = vld [vmem:[#allocation3 + $0x2] sm:$0x1]
        %v1064 = vld [vmem:[#allocation4 + $0x2] sm:$0x1]
        %v1065 = vadd.f32 %v995, %v1063
        %v1066 = vsub.f32 %v1062, %v1065
        %v1067 = vand.u32 2147483647, %v1066
        %v1068 = vsub.f32 0.0, %v1067
        %v1069 = vmul.f32 %v1068, 1.442695
        %v1070 = vpow.pop %v1069
        %vm1071 = vcmp.ge.f32.partialorder %v1066, 0.0
        %v1072 = vsel %vm1071, 1.0, %v1070
        %v1073 = vsel %vm1071, %v1070, 1.0
        %v1074 = vmul.f32 %v1072, %v1059
        %v1075 = vmul.f32 %v1073, %v1064
        %v1076 = vadd.f32 %v1074, %v1075
        %v1077 = vmul.f32 %v1072, %v1061
        %v1078 = vadd.f32 %v1077, %v1073
        %v1079 = vrcp.pop %v1078
        %v1080 = vmul.f32 %v1076, %v1079
        %1081 = vst.msk [vmem:[#allocation5 + $0x2] sm:$0x1] %vm1013, %v1080
        %v1082 = vadd.f32 %v994, %v1062
        %v1083 = vsub.f32 %v1082, %v1063
        %v1084 = vand.u32 2147483647, %v1083
        %v1085 = vsub.f32 0.0, %v1084
        %v1086 = vmul.f32 %v1085, 1.442695
        %v1087 = vpow.pop %v1086
        %vm1088 = vcmp.ge.f32.partialorder %v1083, 0.0
        %v1089 = vsel %vm1088, 1.0, %v1087
        %v1090 = vsel %vm1088, %v1087, 1.0
        %v1091 = vmul.f32 %v1089, %v1059
        %v1092 = vmul.f32 %v1090, %v1064
        %v1093 = vadd.f32 %v1091, %v1092
        %v1094 = vmul.f32 %v1089, %v1061
        %v1095 = vadd.f32 %v1094, %v1090
        %v1096 = vmax.f32 %v1082, %v1063
        %v1097 = vld [vmem:[#allocation3 + $0x3] sm:$0x1]
        %v1098 = vld [vmem:[#allocation4 + $0x3] sm:$0x1]
        %v1099 = vadd.f32 %v995, %v1097
        %v1100 = vsub.f32 %v1096, %v1099
        %v1101 = vand.u32 2147483647, %v1100
        %v1102 = vsub.f32 0.0, %v1101
        %v1103 = vmul.f32 %v1102, 1.442695
        %v1104 = vpow.pop %v1103
        %vm1105 = vcmp.ge.f32.partialorder %v1100, 0.0
        %v1106 = vsel %vm1105, 1.0, %v1104
        %v1107 = vsel %vm1105, %v1104, 1.0
        %v1108 = vmul.f32 %v1106, %v1093
        %v1109 = vmul.f32 %v1107, %v1098
        %v1110 = vadd.f32 %v1108, %v1109
        %v1111 = vmul.f32 %v1106, %v1095
        %v1112 = vadd.f32 %v1111, %v1107
        %v1113 = vrcp.pop %v1112
        %v1114 = vmul.f32 %v1110, %v1113
        %1115 = vst.msk [vmem:[#allocation5 + $0x3] sm:$0x1] %vm1013, %v1114
        %v1116 = vadd.f32 %v994, %v1096
        %v1117 = vsub.f32 %v1116, %v1097
        %v1118 = vand.u32 2147483647, %v1117
        %v1119 = vsub.f32 0.0, %v1118
        %v1120 = vmul.f32 %v1119, 1.442695
        %v1121 = vpow.pop %v1120
        %vm1122 = vcmp.ge.f32.partialorder %v1117, 0.0
        %v1123 = vsel %vm1122, 1.0, %v1121
        %v1124 = vsel %vm1122, %v1121, 1.0
        %v1125 = vmul.f32 %v1123, %v1093
        %v1126 = vmul.f32 %v1124, %v1098
        %v1127 = vadd.f32 %v1125, %v1126
        %v1128 = vmul.f32 %v1123, %v1095
        %v1129 = vadd.f32 %v1128, %v1124
        %v1130 = vmax.f32 %v1116, %v1097
        %v1131 = vld [vmem:[#allocation3 + $0x4] sm:$0x1]
        %v1132 = vld [vmem:[#allocation4 + $0x4] sm:$0x1]
        %v1133 = vadd.f32 %v995, %v1131
        %v1134 = vsub.f32 %v1130, %v1133
        %v1135 = vand.u32 2147483647, %v1134
        %v1136 = vsub.f32 0.0, %v1135
        %v1137 = vmul.f32 %v1136, 1.442695
        %v1138 = vpow.pop %v1137
        %vm1139 = vcmp.ge.f32.partialorder %v1134, 0.0
        %v1140 = vsel %vm1139, 1.0, %v1138
        %v1141 = vsel %vm1139, %v1138, 1.0
        %v1142 = vmul.f32 %v1140, %v1127
        %v1143 = vmul.f32 %v1141, %v1132
        %v1144 = vadd.f32 %v1142, %v1143
        %v1145 = vmul.f32 %v1140, %v1129
        %v1146 = vadd.f32 %v1145, %v1141
        %v1147 = vrcp.pop %v1146
        %v1148 = vmul.f32 %v1144, %v1147
        %1149 = vst.msk [vmem:[#allocation5 + $0x4] sm:$0x1] %vm1013, %v1148
        %v1150 = vadd.f32 %v994, %v1130
        %v1151 = vsub.f32 %v1150, %v1131
        %v1152 = vand.u32 2147483647, %v1151
        %v1153 = vsub.f32 0.0, %v1152
        %v1154 = vmul.f32 %v1153, 1.442695
        %v1155 = vpow.pop %v1154
        %vm1156 = vcmp.ge.f32.partialorder %v1151, 0.0
        %v1157 = vsel %vm1156, 1.0, %v1155
        %v1158 = vsel %vm1156, %v1155, 1.0
        %v1159 = vmul.f32 %v1157, %v1127
        %v1160 = vmul.f32 %v1158, %v1132
        %v1161 = vadd.f32 %v1159, %v1160
        %v1162 = vmul.f32 %v1157, %v1129
        %v1163 = vadd.f32 %v1162, %v1158
        %v1164 = vmax.f32 %v1150, %v1131
        %v1165 = vld [vmem:[#allocation3 + $0x5] sm:$0x1]
        %v1166 = vld [vmem:[#allocation4 + $0x5] sm:$0x1]
        %v1167 = vadd.f32 %v995, %v1165
        %v1168 = vsub.f32 %v1164, %v1167
        %v1169 = vand.u32 2147483647, %v1168
        %v1170 = vsub.f32 0.0, %v1169
        %v1171 = vmul.f32 %v1170, 1.442695
        %v1172 = vpow.pop %v1171
        %vm1173 = vcmp.ge.f32.partialorder %v1168, 0.0
        %v1174 = vsel %vm1173, 1.0, %v1172
        %v1175 = vsel %vm1173, %v1172, 1.0
        %v1176 = vmul.f32 %v1174, %v1161
        %v1177 = vmul.f32 %v1175, %v1166
        %v1178 = vadd.f32 %v1176, %v1177
        %v1179 = vmul.f32 %v1174, %v1163
        %v1180 = vadd.f32 %v1179, %v1175
        %v1181 = vrcp.pop %v1180
        %v1182 = vmul.f32 %v1178, %v1181
        %1183 = vst.msk [vmem:[#allocation5 + $0x5] sm:$0x1] %vm1013, %v1182
        %v1184 = vadd.f32 %v994, %v1164
        %v1185 = vsub.f32 %v1184, %v1165
        %v1186 = vand.u32 2147483647, %v1185
        %v1187 = vsub.f32 0.0, %v1186
        %v1188 = vmul.f32 %v1187, 1.442695
        %v1189 = vpow.pop %v1188
        %vm1190 = vcmp.ge.f32.partialorder %v1185, 0.0
        %v1191 = vsel %vm1190, 1.0, %v1189
        %v1192 = vsel %vm1190, %v1189, 1.0
        %v1193 = vmul.f32 %v1191, %v1161
        %v1194 = vmul.f32 %v1192, %v1166
        %v1195 = vadd.f32 %v1193, %v1194
        %v1196 = vmul.f32 %v1191, %v1163
        %v1197 = vadd.f32 %v1196, %v1192
        %v1198 = vmax.f32 %v1184, %v1165
        %v1199 = vld [vmem:[#allocation3 + $0x6] sm:$0x1]
        %v1200 = vld [vmem:[#allocation4 + $0x6] sm:$0x1]
        %v1201 = vadd.f32 %v995, %v1199
        %v1202 = vsub.f32 %v1198, %v1201
        %v1203 = vand.u32 2147483647, %v1202
        %v1204 = vsub.f32 0.0, %v1203
        %v1205 = vmul.f32 %v1204, 1.442695
        %v1206 = vpow.pop %v1205
        %vm1207 = vcmp.ge.f32.partialorder %v1202, 0.0
        %v1208 = vsel %vm1207, 1.0, %v1206
        %v1209 = vsel %vm1207, %v1206, 1.0
        %v1210 = vmul.f32 %v1208, %v1195
        %v1211 = vmul.f32 %v1209, %v1200
        %v1212 = vadd.f32 %v1210, %v1211
        %v1213 = vmul.f32 %v1208, %v1197
        %v1214 = vadd.f32 %v1213, %v1209
        %v1215 = vrcp.pop %v1214
        %v1216 = vmul.f32 %v1212, %v1215
        %1217 = vst.msk [vmem:[#allocation5 + $0x6] sm:$0x1] %vm1013, %v1216
        %v1218 = vadd.f32 %v994, %v1198
        %v1219 = vsub.f32 %v1218, %v1199
        %v1220 = vand.u32 2147483647, %v1219
        %v1221 = vsub.f32 0.0, %v1220
        %v1222 = vmul.f32 %v1221, 1.442695
        %v1223 = vpow.pop %v1222
        %vm1224 = vcmp.ge.f32.partialorder %v1219, 0.0
        %v1225 = vsel %vm1224, 1.0, %v1223
        %v1226 = vsel %vm1224, %v1223, 1.0
        %v1227 = vmul.f32 %v1225, %v1195
        %v1228 = vmul.f32 %v1226, %v1200
        %v1229 = vadd.f32 %v1227, %v1228
        %v1230 = vmul.f32 %v1225, %v1197
        %v1231 = vadd.f32 %v1230, %v1226
        %v1232 = vmax.f32 %v1218, %v1199
        %v1233 = vld [vmem:[#allocation3 + $0x7] sm:$0x1]
        %v1234 = vld [vmem:[#allocation4 + $0x7] sm:$0x1]
        %v1235 = vadd.f32 %v995, %v1233
        %v1236 = vsub.f32 %v1232, %v1235
        %v1237 = vand.u32 2147483647, %v1236
        %v1238 = vsub.f32 0.0, %v1237
        %v1239 = vmul.f32 %v1238, 1.442695
        %v1240 = vpow.pop %v1239
        %vm1241 = vcmp.ge.f32.partialorder %v1236, 0.0
        %v1242 = vsel %vm1241, 1.0, %v1240
        %v1243 = vsel %vm1241, %v1240, 1.0
        %v1244 = vmul.f32 %v1242, %v1229
        %v1245 = vmul.f32 %v1243, %v1234
        %v1246 = vadd.f32 %v1244, %v1245
        %v1247 = vmul.f32 %v1242, %v1231
        %v1248 = vadd.f32 %v1247, %v1243
        %v1249 = vrcp.pop %v1248
        %v1250 = vmul.f32 %v1246, %v1249
        %1251 = vst.msk [vmem:[#allocation5 + $0x7] sm:$0x1] %vm1013, %v1250
        %v1252 = vld [vmem:[#allocation5] sm:$0xff]
        %1254 = vrot.lane.b32.xlu0 %v1252, 64
        %v1255 = vpop.permute.xlu0 %1254
        %v1257 = vmul.f32 %v993, %v1255
        %v1258 = vpack.c.bf16 %v1257, %v1257
        %v1259 = vld [vmem:[%s765] sm:$0xf]
        %v1260 = vld [vmem:[%s765 + $0x4] sm:$0xf]
        %v1261 = vld [vmem:[%s765 + $0x8] sm:$0xf]
        %v1262 = vld [vmem:[%s765 + $0xc] sm:$0xf]
        %1264 = vrot.lane.b32.xlu0 %v1258, 64
        %v1265 = vpop.permute.xlu0 %1264
        %v1270 = vunpack.c.l.b16 %v1259
        %v1271 = vunpack.c.l.b16 %v1260
        %v1272 = vunpack.c.l.b16 %v1261
        %v1273 = vunpack.c.l.b16 %v1262
        %v1274 = vpack.c.b16 %v1271, %v1270
        %v1275 = vpack.c.b16 %v1273, %v1272
        %v1279 = vsel %vm831, %v1265, 0
        %1281 = vmatprep.subr.bf16.mxu0 0
        %1282 = vmatpush1.bf16.msra.mxu0 %v1274
        %1283 = vmatprep.subr.bf16.mxu0 0
        %1284 = vmatpush1.bf16.msra.mxu0 %v1275
        %1285 = vmatprep.subr.bf16.mxu0 0
        %1286 = vmatpush1.bf16.msra.mxu0 0
        %1287 = vmatprep.subr.bf16.mxu0 0
        %1288 = vmatpush1.bf16.msra.mxu0 0
        %1289 = vmatprep.subr.bf16.mxu0 0
        %1290 = vmatpush1.bf16.msra.mxu0 0
        %1291 = vmatprep.subr.bf16.mxu0 0
        %1292 = vmatpush1.bf16.msra.mxu0 0
        %1293 = vmatprep.subr.bf16.mxu0 0
        %1294 = vmatpush1.bf16.msra.mxu0 0
        %1295 = vmatprep.subr.bf16.mxu0 0
        %1296 = vmatpush1.bf16.msra.mxu0 0
        %1297 = vmatprep.subr.bf16.mxu0 0
        %1298 = vmatpush1.bf16.msra.mxu0 0
        %1299 = vmatprep.subr.bf16.mxu0 0
        %1300 = vmatpush1.bf16.msra.mxu0 0
        %1301 = vmatprep.subr.bf16.mxu0 0
        %1302 = vmatpush1.bf16.msra.mxu0 0
        %1303 = vmatprep.subr.bf16.mxu0 0
        %1304 = vmatpush1.bf16.msra.mxu0 0
        %1305 = vmatprep.subr.bf16.mxu0 0
        %1306 = vmatpush1.bf16.msra.mxu0 0
        %1307 = vmatprep.subr.bf16.mxu0 0
        %1308 = vmatpush1.bf16.msra.mxu0 0
        %1309 = vmatprep.subr.bf16.mxu0 0
        %1310 = vmatpush1.bf16.msra.mxu0 0
        %1311 = vmatprep.subr.bf16.mxu0 0
        %1312 = vmatpush1.bf16.msra.mxu0 0
        %1313 = vmatprep.mubr.bf16.mxu0 0
        %1314 = vmatmul.mubr.bf16.gmra.mrb[0].mxu0 %v1279
        %v1315 = vpop.f32.mrb[0].mxu0
        %v1316 = vadd.f32 0.0, %v1315
        %v1317 = vpop.f32.mrb[0].mxu0
        %v1318 = vpop.f32.mrb[0].mxu0
        %v1319 = vpop.f32.mrb[0].mxu0
        %1320 = vdwg.mxu0
        %v1321 = vadd.f32 %v825, %v1316
        %v1322 = vld [vmem:[%s768] sm:$0x1]
        %v1323 = vld [vmem:[%s771] sm:$0x1]
        %v1324 = vsel %vm831, %v1321, 0.0
        %1325 = vadd.xlane.f32.xlu0 %v1324
        %v1326 = vpop.xlane.xlu0 %1325
        %v1327 = vmul.f32 %v1326, %v835
        %v1328 = vsub.f32 %v1321, %v1327
        %v1329 = vmul.f32 %v1328, %v1328
        %v1330 = vsel %vm831, %v1329, 0.0
        %1331 = vadd.xlane.f32.xlu0 %v1330
        %v1332 = vpop.xlane.xlu0 %1331
        %v1333 = vmul.f32 %v1332, %v835
        %v1334 = vadd.f32 %v1333, 1e-05
        %v1335 = vrsqrt.pop %v1334
        %v1336 = vmul.f32 %v1328, %v1335
        %v1338 = vlaneseq
        %v1339 = vshrl.u32 %v1338, 7
        %v1340 = vsub.s32 0, %v1339
        %v1341 = vrot.slane %v1322, %v1340
        %v1343 = vmul.f32 %v1336, %v1341
        %v1345 = vlaneseq
        %v1346 = vshrl.u32 %v1345, 7
        %v1347 = vsub.s32 0, %v1346
        %v1348 = vrot.slane %v1323, %v1347
        %v1350 = vadd.f32 %v1343, %v1348
        %v1351 = vrot.slane %v1350, 7
        %v1352 = vsel %vm828, 0.0, %v1351
        %v1353 = vpack.c.bf16 %v1350, %v1350
        %v1354 = vld [vmem:[%s776] sm:$0xff]
        %v1355 = vld [vmem:[%s776 + $0x8] sm:$0xff]
        %v1356 = vld [vmem:[%s776 + $0x10] sm:$0xff]
        %v1357 = vld [vmem:[%s776 + $0x18] sm:$0xff]
        %v1358 = vpack.c.bf16 %v1352, %v1352
        %v1359 = vld [vmem:[%s781] sm:$0xff]
        %v1360 = vld [vmem:[%s781 + $0x8] sm:$0xff]
        %v1361 = vld [vmem:[%s781 + $0x10] sm:$0xff]
        %v1362 = vld [vmem:[%s781 + $0x18] sm:$0xff]
        %v1367 = vunpack.c.l.b16 %v1359
        %v1368 = vunpack.c.h.b16 %v1359
        %v1369 = vunpack.c.l.b16 %v1360
        %v1370 = vunpack.c.h.b16 %v1360
        %v1371 = vunpack.c.l.b16 %v1361
        %v1372 = vunpack.c.h.b16 %v1361
        %v1373 = vunpack.c.l.b16 %v1362
        %v1374 = vunpack.c.h.b16 %v1362
        %v1375 = vpack.c.b16 %v1369, %v1367
        %v1376 = vpack.c.b16 %v1370, %v1368
        %v1377 = vpack.c.b16 %v1373, %v1371
        %v1378 = vpack.c.b16 %v1374, %v1372
        %v1384 = vsel %vm831, %v1358, 0
        %1386 = vmatprep.subr.bf16.mxu0 %v1376
        %1387 = vmatpush1.bf16.msra.mxu0 %v1375
        %1388 = vmatprep.subr.bf16.mxu0 %v1378
        %1389 = vmatpush1.bf16.msra.mxu0 %v1377
        %1390 = vmatprep.subr.bf16.mxu0 0
        %1391 = vmatpush1.bf16.msra.mxu0 0
        %1392 = vmatprep.subr.bf16.mxu0 0
        %1393 = vmatpush1.bf16.msra.mxu0 0
        %1394 = vmatprep.subr.bf16.mxu0 0
        %1395 = vmatpush1.bf16.msra.mxu0 0
        %1396 = vmatprep.subr.bf16.mxu0 0
        %1397 = vmatpush1.bf16.msra.mxu0 0
        %1398 = vmatprep.subr.bf16.mxu0 0
        %1399 = vmatpush1.bf16.msra.mxu0 0
        %1400 = vmatprep.subr.bf16.mxu0 0
        %1401 = vmatpush1.bf16.msra.mxu0 0
        %1402 = vmatprep.subr.bf16.mxu0 0
        %1403 = vmatpush1.bf16.msra.mxu0 0
        %1404 = vmatprep.subr.bf16.mxu0 0
        %1405 = vmatpush1.bf16.msra.mxu0 0
        %1406 = vmatprep.subr.bf16.mxu0 0
        %1407 = vmatpush1.bf16.msra.mxu0 0
        %1408 = vmatprep.subr.bf16.mxu0 0
        %1409 = vmatpush1.bf16.msra.mxu0 0
        %1410 = vmatprep.subr.bf16.mxu0 0
        %1411 = vmatpush1.bf16.msra.mxu0 0
        %1412 = vmatprep.subr.bf16.mxu0 0
        %1413 = vmatpush1.bf16.msra.mxu0 0
        %1414 = vmatprep.subr.bf16.mxu0 0
        %1415 = vmatpush1.bf16.msra.mxu0 0
        %1416 = vmatprep.subr.bf16.mxu0 0
        %1417 = vmatpush1.bf16.msra.mxu0 0
        %1418 = vmatprep.mubr.bf16.mxu0 0
        %1419 = vmatmul.mubr.bf16.gmra.mrb[0].mxu0 %v1384
        %v1420 = vpop.f32.mrb[0].mxu0
        %v1421 = vadd.f32 0.0, %v1420
        %v1422 = vpop.f32.mrb[0].mxu0
        %v1423 = vadd.f32 0.0, %v1422
        %v1424 = vpop.f32.mrb[0].mxu0
        %v1425 = vpop.f32.mrb[0].mxu0
        %1426 = vdwg.mxu0
        %v1431 = vunpack.c.l.b16 %v1354
        %v1432 = vunpack.c.h.b16 %v1354
        %v1433 = vunpack.c.l.b16 %v1355
        %v1434 = vunpack.c.h.b16 %v1355
        %v1435 = vunpack.c.l.b16 %v1356
        %v1436 = vunpack.c.h.b16 %v1356
        %v1437 = vunpack.c.l.b16 %v1357
        %v1438 = vunpack.c.h.b16 %v1357
        %v1439 = vpack.c.b16 %v1433, %v1431
        %v1440 = vpack.c.b16 %v1434, %v1432
        %v1441 = vpack.c.b16 %v1437, %v1435
        %v1442 = vpack.c.b16 %v1438, %v1436
        %v1448 = vsel %vm831, %v1353, 0
        %1450 = vmatprep.subr.bf16.mxu0 %v1440
        %1451 = vmatpush1.bf16.msra.mxu0 %v1439
        %1452 = vmatprep.subr.bf16.mxu0 %v1442
        %1453 = vmatpush1.bf16.msra.mxu0 %v1441
        %1454 = vmatprep.subr.bf16.mxu0 0
        %1455 = vmatpush1.bf16.msra.mxu0 0
        %1456 = vmatprep.subr.bf16.mxu0 0
        %1457 = vmatpush1.bf16.msra.mxu0 0
        %1458 = vmatprep.subr.bf16.mxu0 0
        %1459 = vmatpush1.bf16.msra.mxu0 0
        %1460 = vmatprep.subr.bf16.mxu0 0
        %1461 = vmatpush1.bf16.msra.mxu0 0
        %1462 = vmatprep.subr.bf16.mxu0 0
        %1463 = vmatpush1.bf16.msra.mxu0 0
        %1464 = vmatprep.subr.bf16.mxu0 0
        %1465 = vmatpush1.bf16.msra.mxu0 0
        %1466 = vmatprep.subr.bf16.mxu0 0
        %1467 = vmatpush1.bf16.msra.mxu0 0
        %1468 = vmatprep.subr.bf16.mxu0 0
        %1469 = vmatpush1.bf16.msra.mxu0 0
        %1470 = vmatprep.subr.bf16.mxu0 0
        %1471 = vmatpush1.bf16.msra.mxu0 0
        %1472 = vmatprep.subr.bf16.mxu0 0
        %1473 = vmatpush1.bf16.msra.mxu0 0
        %1474 = vmatprep.subr.bf16.mxu0 0
        %1475 = vmatpush1.bf16.msra.mxu0 0
        %1476 = vmatprep.subr.bf16.mxu0 0
        %1477 = vmatpush1.bf16.msra.mxu0 0
        %1478 = vmatprep.subr.bf16.mxu0 0
        %1479 = vmatpush1.bf16.msra.mxu0 0
        %1480 = vmatprep.subr.bf16.mxu0 0
        %1481 = vmatpush1.bf16.msra.mxu0 0
        %1482 = vmatprep.mubr.bf16.mxu0 0
        %1483 = vmatmul.mubr.bf16.gmra.mrb[0].mxu0 %v1448
        %v1484 = vpop.f32.mrb[0].mxu0
        %v1485 = vadd.f32 %v1421, %v1484
        %v1486 = vpop.f32.mrb[0].mxu0
        %v1487 = vadd.f32 %v1423, %v1486
        %v1488 = vpop.f32.mrb[0].mxu0
        %v1489 = vpop.f32.mrb[0].mxu0
        %1490 = vdwg.mxu0
        %v1491 = vmax.f32 %v1485, 0.0
        %v1492 = vmul.f32 %v1491, %v1491
        %v1493 = vxor.u32 %v1487, 2147483648
        %v1494 = vmul.f32 %v1493, 1.442695
        %v1495 = vpow.pop %v1494
        %v1496 = vadd.f32 %v1495, 1.0
        %v1497 = vrcp.pop %v1496
        %v1498 = vmul.f32 1.0, %v1497
        %v1499 = vpack.c.bf16 %v1492, %v1492
        %v1500 = vld [vmem:[%s786] sm:$0xf]
        %v1501 = vld [vmem:[%s786 + $0x4] sm:$0xf]
        %v1502 = vld [vmem:[%s786 + $0x8] sm:$0xf]
        %v1503 = vld [vmem:[%s786 + $0xc] sm:$0xf]
        %v1504 = vld [vmem:[%s786 + $0x10] sm:$0xf]
        %v1505 = vld [vmem:[%s786 + $0x14] sm:$0xf]
        %v1506 = vld [vmem:[%s786 + $0x18] sm:$0xf]
        %v1507 = vld [vmem:[%s786 + $0x1c] sm:$0xf]
        %v1508 = vld [vmem:[%s786 + $0x20] sm:$0xf]
        %v1509 = vld [vmem:[%s786 + $0x24] sm:$0xf]
        %v1510 = vld [vmem:[%s786 + $0x28] sm:$0xf]
        %v1511 = vld [vmem:[%s786 + $0x2c] sm:$0xf]
        %v1512 = vld [vmem:[%s786 + $0x30] sm:$0xf]
        %v1513 = vld [vmem:[%s786 + $0x34] sm:$0xf]
        %v1514 = vld [vmem:[%s786 + $0x38] sm:$0xf]
        %v1515 = vld [vmem:[%s786 + $0x3c] sm:$0xf]
        %v1532 = vunpack.c.l.b16 %v1500
        %v1533 = vunpack.c.l.b16 %v1501
        %v1534 = vunpack.c.l.b16 %v1502
        %v1535 = vunpack.c.l.b16 %v1503
        %v1536 = vunpack.c.l.b16 %v1504
        %v1537 = vunpack.c.l.b16 %v1505
        %v1538 = vunpack.c.l.b16 %v1506
        %v1539 = vunpack.c.l.b16 %v1507
        %v1540 = vunpack.c.l.b16 %v1508
        %v1541 = vunpack.c.l.b16 %v1509
        %v1542 = vunpack.c.l.b16 %v1510
        %v1543 = vunpack.c.l.b16 %v1511
        %v1544 = vunpack.c.l.b16 %v1512
        %v1545 = vunpack.c.l.b16 %v1513
        %v1546 = vunpack.c.l.b16 %v1514
        %v1547 = vunpack.c.l.b16 %v1515
        %v1548 = vpack.c.b16 %v1533, %v1532
        %v1549 = vpack.c.b16 %v1535, %v1534
        %v1550 = vpack.c.b16 %v1537, %v1536
        %v1551 = vpack.c.b16 %v1539, %v1538
        %v1552 = vpack.c.b16 %v1541, %v1540
        %v1553 = vpack.c.b16 %v1543, %v1542
        %v1554 = vpack.c.b16 %v1545, %v1544
        %v1555 = vpack.c.b16 %v1547, %v1546
        %1564 = vmatprep.subr.bf16.mxu0 0
        %1565 = vmatpush1.bf16.msra.mxu0 %v1548
        %1566 = vmatprep.subr.bf16.mxu0 0
        %1567 = vmatpush1.bf16.msra.mxu0 %v1549
        %1568 = vmatprep.subr.bf16.mxu0 0
        %1569 = vmatpush1.bf16.msra.mxu0 %v1550
        %1570 = vmatprep.subr.bf16.mxu0 0
        %1571 = vmatpush1.bf16.msra.mxu0 %v1551
        %1572 = vmatprep.subr.bf16.mxu0 0
        %1573 = vmatpush1.bf16.msra.mxu0 %v1552
        %1574 = vmatprep.subr.bf16.mxu0 0
        %1575 = vmatpush1.bf16.msra.mxu0 %v1553
        %1576 = vmatprep.subr.bf16.mxu0 0
        %1577 = vmatpush1.bf16.msra.mxu0 %v1554
        %1578 = vmatprep.subr.bf16.mxu0 0
        %1579 = vmatpush1.bf16.msra.mxu0 %v1555
        %1580 = vmatprep.subr.bf16.mxu0 0
        %1581 = vmatpush1.bf16.msra.mxu0 0
        %1582 = vmatprep.subr.bf16.mxu0 0
        %1583 = vmatpush1.bf16.msra.mxu0 0
        %1584 = vmatprep.subr.bf16.mxu0 0
        %1585 = vmatpush1.bf16.msra.mxu0 0
        %1586 = vmatprep.subr.bf16.mxu0 0
        %1587 = vmatpush1.bf16.msra.mxu0 0
        %1588 = vmatprep.subr.bf16.mxu0 0
        %1589 = vmatpush1.bf16.msra.mxu0 0
        %1590 = vmatprep.subr.bf16.mxu0 0
        %1591 = vmatpush1.bf16.msra.mxu0 0
        %1592 = vmatprep.subr.bf16.mxu0 0
        %1593 = vmatpush1.bf16.msra.mxu0 0
        %1594 = vmatprep.subr.bf16.mxu0 0
        %1595 = vmatpush1.bf16.msra.mxu0 0
        %1596 = vmatprep.mubr.bf16.mxu0 0
        %1597 = vmatmul.mubr.bf16.gmra.mrb[0].mxu0 %v1499
        %v1598 = vpop.f32.mrb[0].mxu0
        %v1599 = vadd.f32 0.0, %v1598
        %v1600 = vpop.f32.mrb[0].mxu0
        %v1601 = vpop.f32.mrb[0].mxu0
        %v1602 = vpop.f32.mrb[0].mxu0
        %1603 = vdwg.mxu0
        %v1604 = vmul.f32 %v1498, %v1599
        %v1605 = vadd.f32 %v1321, %v1604
        %1606 = vst.msk [vmem:[#allocation2] sm:$0xff] %vm831, %v1605
        %p1607 = scmp.eq.s32.totalorder %s37, 1
        // Predicated region
        $region97: #{rwkv_forward.1} parent=91 // pred_check
          %p1608 = pneg %p1607
        $region98: #{rwkv_forward.1} parent=91 // pred_check_branch
          %1610 = sbr.rel (%p1608) target = $region100
        $region99: #{rwkv_forward.1} parent=91 // pred_region
          %v1611 = vld [vmem:[%s15] sm:$0x1]
          %v1612 = vld [vmem:[%s16] sm:$0x1]
          %v1613 = vsel %vm831, %v1605, 0.0
          %1614 = vadd.xlane.f32.xlu0 %v1613
          %v1615 = vpop.xlane.xlu0 %1614
          %v1616 = vmul.f32 %v1615, %v835
          %v1617 = vsub.f32 %v1605, %v1616
          %v1618 = vmul.f32 %v1617, %v1617
          %v1619 = vsel %vm831, %v1618, 0.0
          %1620 = vadd.xlane.f32.xlu0 %v1619
          %v1621 = vpop.xlane.xlu0 %1620
          %v1622 = vmul.f32 %v1621, %v835
          %v1623 = vadd.f32 %v1622, 1e-05
          %v1624 = vrsqrt.pop %v1623
          %v1625 = vmul.f32 %v1617, %v1624
          %v1627 = vlaneseq
          %v1628 = vshrl.u32 %v1627, 7
          %v1629 = vsub.s32 0, %v1628
          %v1630 = vrot.slane %v1611, %v1629
          %v1632 = vmul.f32 %v1625, %v1630
          %v1634 = vlaneseq
          %v1635 = vshrl.u32 %v1634, 7
          %v1636 = vsub.s32 0, %v1635
          %v1637 = vrot.slane %v1612, %v1636
          %v1639 = vadd.f32 %v1632, %v1637
          %v1640 = vpack.c.bf16 %v1639, %v1639
          %v1641 = vld [vmem:[%s17] sm:$0xf]
          %v1642 = vld [vmem:[%s17 + $0x4] sm:$0xf]
          %v1643 = vld [vmem:[%s17 + $0x8] sm:$0xf]
          %v1644 = vld [vmem:[%s17 + $0xc] sm:$0xf]
          %v1649 = vunpack.c.l.b16 %v1641
          %v1650 = vunpack.c.l.b16 %v1642
          %v1651 = vunpack.c.l.b16 %v1643
          %v1652 = vunpack.c.l.b16 %v1644
          %v1653 = vpack.c.b16 %v1650, %v1649
          %v1654 = vpack.c.b16 %v1652, %v1651
          %v1658 = vsel %vm831, %v1640, 0
          %1660 = vmatprep.subr.bf16.mxu0 0
          %1661 = vmatpush1.bf16.msra.mxu0 %v1653
          %1662 = vmatprep.subr.bf16.mxu0 0
          %1663 = vmatpush1.bf16.msra.mxu0 %v1654
          %1664 = vmatprep.subr.bf16.mxu0 0
          %1665 = vmatpush1.bf16.msra.mxu0 0
          %1666 = vmatprep.subr.bf16.mxu0 0
          %1667 = vmatpush1.bf16.msra.mxu0 0
          %1668 = vmatprep.subr.bf16.mxu0 0
          %1669 = vmatpush1.bf16.msra.mxu0 0
          %1670 = vmatprep.subr.bf16.mxu0 0
          %1671 = vmatpush1.bf16.msra.mxu0 0
          %1672 = vmatprep.subr.bf16.mxu0 0
          %1673 = vmatpush1.bf16.msra.mxu0 0
          %1674 = vmatprep.subr.bf16.mxu0 0
          %1675 = vmatpush1.bf16.msra.mxu0 0
          %1676 = vmatprep.subr.bf16.mxu0 0
          %1677 = vmatpush1.bf16.msra.mxu0 0
          %1678 = vmatprep.subr.bf16.mxu0 0
          %1679 = vmatpush1.bf16.msra.mxu0 0
          %1680 = vmatprep.subr.bf16.mxu0 0
          %1681 = vmatpush1.bf16.msra.mxu0 0
          %1682 = vmatprep.subr.bf16.mxu0 0
          %1683 = vmatpush1.bf16.msra.mxu0 0
          %1684 = vmatprep.subr.bf16.mxu0 0
          %1685 = vmatpush1.bf16.msra.mxu0 0
          %1686 = vmatprep.subr.bf16.mxu0 0
          %1687 = vmatpush1.bf16.msra.mxu0 0
          %1688 = vmatprep.subr.bf16.mxu0 0
          %1689 = vmatpush1.bf16.msra.mxu0 0
          %1690 = vmatprep.subr.bf16.mxu0 0
          %1691 = vmatpush1.bf16.msra.mxu0 0
          %1692 = vmatprep.mubr.bf16.mxu0 0
          %1693 = vmatmul.mubr.bf16.gmra.mrb[0].mxu0 %v1658
          %v1694 = vpop.f32.mrb[0].mxu0
          %v1695 = vadd.f32 0.0, %v1694
          %v1696 = vpop.f32.mrb[0].mxu0
          %v1697 = vpop.f32.mrb[0].mxu0
          %v1698 = vpop.f32.mrb[0].mxu0
          %1699 = vdwg.mxu0
          %1700 = vst [vmem:[%s734] sm:$0xff] %v1695
        $region100: #{rwkv_forward.1} parent=91 // pred_fallthru
          _
        %s1701 = sand.u32 %s495, 1
        %s1702 = scalar_lea.sflag [#allocation7], %s1701
        %s1703 = sand.u32 %s495, 1
        %s1704 = smul.addr %s1703, 8
        %s1705 = scalar_lea.vmem [#allocation6], %s1704
        // Predicated region
        $region101: #{rwkv_forward.1} parent=91 // pred_check
          %p1706 = pneg %p505
        $region102: #{rwkv_forward.1} parent=91 // pred_check_branch
          %1708 = sbr.rel (%p1706) target = $region104
        $region103: #{rwkv_forward.1} parent=91 // pred_region
          %s1710 = ssub.s32 128, 128
          %1711 = vsyncadd %s1702, %s1710
          %s1712 = smul.addr %s36, 128
          %s1713 = scalar_lea.hbm %s18, %s1712
          %s1715 = sshll.u32 %s1705, 4
          %s1716 = int_to_ptr.vmem [resolvable:$true] %s1715
          %1718 = dma.vmem_to_hbm [thread:$0]  %s1716, 128, %s1713, %s1702
        $region104: #{rwkv_forward.1} parent=91 // pred_fallthru
          _
      $region92: #{rwkv_forward.1} parent=5 // pred_fallthru
        _
      %p1719 = scmp.le.s32.totalorder 2, %s27
      // Predicated region
      $region105: #{rwkv_forward.1} parent=5 // pred_check
        %p1720 = pneg %p1719
      $region106: #{rwkv_forward.1} parent=5 // pred_check_branch
        %1722 = sbr.rel (%p1720) target = $region108
      $region107: #{rwkv_forward.1} parent=5 // pred_region
        %s1723 = ssub.s32 %s27, 2
        // Predicated region
        $region109: #{rwkv_forward.1} parent=107 // pred_check
          %p1724 = pneg %p511
        $region110: #{rwkv_forward.1} parent=107 // pred_check_branch
          %1726 = sbr.rel (%p1724) target = $region112
        $region111: #{rwkv_forward.1} parent=107 // pred_region
          %s1727 = sand.u32 %s496, 1
          %s1728 = scalar_lea.sflag [#allocation7], %s1727
          %s1729 = sand.u32 %s496, 1
          %s1730 = smul.addr %s1729, 8
          %s1731 = scalar_lea.vmem [#allocation6], %s1730
          %1732 = dma.done %s1728, 128
        $region112: #{rwkv_forward.1} parent=107 // pred_fallthru
          _
      $region108: #{rwkv_forward.1} parent=5 // pred_fallthru
        _
    $region6: #{rwkv_forward.1} parent=1 // loop_footer
      %s31 = sadd.s32 1, %s27
    $region7: #{rwkv_forward.1} parent=1 // loop_footer_branch
      %26 = sbr.rel target = $region3
    $region8: #{rwkv_forward.1} parent=1 // loop_exit
      _
    %1733 = vsyncpa [#allocation7], 1
    %s1734 = scalar_lea.sflag [#allocation7], 1
    %1735 = vsyncpa %s1734, 1

</llo_original>
